<compile_context>
chip_gen: v7x
topology: tpu7x:2x2x1
jax: 0.10.0
libtpu: 0.0.40
codegen_flags: <defaults>
</compile_context>

<pallas_src>
import math
from functools import partial

import jax
import jax.numpy as jnp
from jax.experimental import pallas as pl
from jax.experimental.pallas import tpu as pltpu


# --------------------------------------------------------------------------
# Pallas kernel: fused (convKxK+BN+SiLU) [-> (conv1x1+BN)] [-> +residual]
# one grid step = one batch image x one tile of TILE_H output rows.
# --------------------------------------------------------------------------
def _fused_mbconv_kernel(xps_ref, w1_ref, b1_ref, *rest, K, stride, tile_h, wo,
                         use_res, single_conv):
    # refs:
    #   xps_ref : (s, s, Hs, Ws, Cin)   bf16  padded, stride-phase-split input
    #   w1_ref  : (K*K*Cin, Cexp)       bf16  folded-BN expand-conv weights
    #   b1_ref  : (1, Cexp)             f32
    #   [w2_ref : (Cexp, Cout) bf16, b2_ref : (1, Cout) f32]  (two-conv variant)
    #   [res_ref: (Cout, tile_h*Wo)     f32   residual, already NCHW layout]
    #   o_ref   : (Cout, tile_h*Wo)     out dtype, NCHW layout
    rest = list(rest)
    if single_conv:
        w2_ref = b2_ref = None
    else:
        w2_ref = rest.pop(0)
        b2_ref = rest.pop(0)
    res_ref = rest.pop(0) if use_res else None
    o_ref = rest.pop(0)

    cin = xps_ref.shape[-1]
    hw = tile_h * wo
    t0 = pl.multiple_of(pl.program_id(1) * tile_h, tile_h)

    # Gather the K*K shifted taps and fuse them into one deep contraction.
    taps = []
    for kh in range(K):
        ph, dh = kh % stride, kh // stride
        for kw in range(K):
            pw, dw = kw % stride, kw // stride
            taps.append(xps_ref[ph, pw, pl.ds(t0 + dh, tile_h),
                                pl.ds(dw, wo), :])
    tap = jnp.concatenate(taps, axis=-1)            # (tile_h, Wo, K*K*Cin) bf16
    tap = tap.reshape(hw, K * K * cin)

    # KxK conv (+ folded BN) as a single MXU matmul, f32 accumulation.
    h = jnp.dot(tap, w1_ref[...], preferred_element_type=jnp.float32)
    h = h + b1_ref[...]
    # SiLU: sigmoid on the EUP in bf16 (v6e/v7x bf16 EUP; widened on v5e),
    # multiply kept in f32.
    h = h * jax.nn.sigmoid(h.astype(jnp.bfloat16)).astype(jnp.float32)

    if single_conv:
        o = h                                       # (hw, Cout) f32
    else:
        o = jnp.dot(h.astype(w2_ref.dtype), w2_ref[...],
                    preferred_element_type=jnp.float32) + b2_ref[...]

    o = o.T                                         # (Cout, hw): NCHW layout
    if use_res:
        o = o + res_ref[...]                        # f32 identity skip path
    o_ref[...] = o.astype(o_ref.dtype)


# --------------------------------------------------------------------------
# JAX glue: BN folding, padding + stride-phase split, tiling, pallas_call
# --------------------------------------------------------------------------
def _fold_bn(w_hwio, gamma, beta, mean, var, eps):
    """Fold eval-mode BatchNorm into conv weight (HWIO) and bias."""
    scale = gamma / jnp.sqrt(var + eps)
    return w_hwio * scale[None, None, None, :], beta - mean * scale


def _round_up(x, m):
    return ((x + m - 1) // m) * m


def _pick_tile_h(ho, wo, per_row_bytes, budget_bytes=4 << 20):
    """Byte-aware row-tile size.

    If the whole image fits the per-tile budget, use a single row tile
    (full-dim block => no alignment constraints).  Otherwise pick a multiple of
    `128 // gcd(wo, 128)` so the flat (tile_h*Wo) last dim of the output /
    residual blocks stays a multiple of 128 (unmasked, spec-legal stores).
    """
    cap = max(1, budget_bytes // max(per_row_bytes, 1))
    if ho <= cap:
        return ho
    granule = 128 // math.gcd(wo, 128)
    th = max(granule, (cap // granule) * granule)
    return ho if th >= ho else th


def fused_mbconv_forward(x_nchw, params, *, kernel, stride, eps,
                         out_dtype=jnp.bfloat16):
    """FusedMBConv forward. Input/output: NCHW (matches the PyTorch module)."""
    K, s = kernel, stride
    pad = (K - 1) // 2
    N, Cin, H, W = x_nchw.shape

    single_conv = "w2" not in params
    w1_eff, b1_eff = _fold_bn(params["w1"], params["g1"], params["b1"],
                              params["m1"], params["v1"], eps)
    if single_conv:
        Cout = w1_eff.shape[-1]
        w2_eff = b2_eff = None
    else:
        w2_eff, b2_eff = _fold_bn(params["w2"], params["g2"], params["b2"],
                                  params["m2"], params["v2"], eps)
        Cout = w2_eff.shape[-1]

    use_res = (s == 1) and (Cin == Cout)

    # Pad output channels to a multiple of 8 (sublane-friendly transpose/store);
    # extra channels are zero and sliced off in the wrapper.
    Cout_k = max(8, _round_up(Cout, 8))
    cpad = Cout_k - Cout
    if single_conv:
        if cpad:
            w1_eff = jnp.pad(w1_eff, ((0, 0), (0, 0), (0, 0), (0, cpad)))
            b1_eff = jnp.pad(b1_eff, ((0, cpad),))
        w2m = b2v = None
    else:
        if cpad:
            w2_eff = jnp.pad(w2_eff, ((0, 0), (0, 0), (0, 0), (0, cpad)))
            b2_eff = jnp.pad(b2_eff, ((0, cpad),))
        w2m = w2_eff.reshape(-1, Cout_k).astype(jnp.bfloat16)
        b2v = b2_eff.reshape(1, Cout_k).astype(jnp.float32)

    Cexp_k = w1_eff.shape[-1]
    # expand-conv weights as one (K*K*Cin, Cexp) matrix; (kh, kw, ci) row order
    # matches the in-kernel tap concatenation.
    w1m = w1_eff.reshape(K * K * Cin, Cexp_k).astype(jnp.bfloat16)
    b1v = b1_eff.reshape(1, Cexp_k).astype(jnp.float32)

    Ho = (H + 2 * pad - K) // s + 1
    Wo = (W + 2 * pad - K) // s + 1
    d_max = (K - 1) // s                  # max in-kernel row/col tap offset

    # ---- row tiling (byte-aware) ----
    per_row = Wo * (K * K * Cin * 2 + Cexp_k * 6 + Cout_k * 12 + Cout_k * 4)
    tile_h = _pick_tile_h(Ho, Wo, per_row)
    grid_t = pl.cdiv(Ho, tile_h)
    Ho_pad = grid_t * tile_h

    # ---- bf16 cast BEFORE transpose / pad / phase-split ----
    x = jnp.transpose(x_nchw.astype(jnp.bfloat16), (0, 2, 3, 1))   # NHWC bf16
    xp = jnp.pad(x, ((0, 0), (pad, pad), (pad, pad), (0, 0)))
    Hs = Ho_pad + d_max                   # phase rows the kernel will touch
    Ws = Wo + d_max
    if s == 1:
        # No phase split needed: zero-pad rows/cols to (Hs, Ws) and add the two
        # singleton phase dims (free reshape, no extra copy pass).
        xp = xp[:, :Hs, :Ws, :]
        xp = jnp.pad(xp, ((0, 0), (0, Hs - xp.shape[1]),
                          (0, Ws - xp.shape[2]), (0, 0)))
        xps = xp[:, None, None]                            # (N,1,1,Hs,Ws,Cin)
    else:
        # xps[:, ph, pw, r, c, :] == x_pad[:, s*r + ph, s*c + pw, :]
        rows = []
        for ph in range(s):
            cols = []
            for pw in range(s):
                sub = xp[:, ph::s, pw::s, :][:, :Hs, :Ws, :]
                sub = jnp.pad(sub, ((0, 0), (0, Hs - sub.shape[1]),
                                    (0, Ws - sub.shape[2]), (0, 0)))
                cols.append(sub)
            rows.append(jnp.stack(cols, axis=1))
        xps = jnp.stack(rows, axis=1)                      # (N,s,s,Hs,Ws,Cin)

    s_dim, Hsx, Wsx = xps.shape[1], xps.shape[3], xps.shape[4]

    kernel_fn = partial(_fused_mbconv_kernel, K=K, stride=s, tile_h=tile_h,
                        wo=Wo, use_res=use_res, single_conv=single_conv)

    in_specs = [
        # Whole padded image per batch element; its block index only changes
        # with n, so it is DMA'd from HBM once per image.
        pl.BlockSpec((pl.Squeezed(), s_dim, s_dim, Hsx, Wsx, Cin),
                     lambda n, t: (n, 0, 0, 0, 0, 0)),
        pl.BlockSpec((K * K * Cin, Cexp_k), lambda n, t: (0, 0)),
        pl.BlockSpec((1, Cexp_k), lambda n, t: (0, 0)),
    ]
    args = [xps, w1m, b1v]
    if not single_conv:
        in_specs += [pl.BlockSpec((Cexp_k, Cout_k), lambda n, t: (0, 0)),
                     pl.BlockSpec((1, Cout_k), lambda n, t: (0, 0))]
        args += [w2m, b2v]
    if use_res:
        # f32 identity, already NCHW -> lands in the output layout for free.
        xres = x_nchw.astype(jnp.float32)
        if cpad:
            xres = jnp.pad(xres, ((0, 0), (0, cpad), (0, 0), (0, 0)))
        if Ho_pad > Ho:
            xres = jnp.pad(xres, ((0, 0), (0, 0), (0, Ho_pad - Ho), (0, 0)))
        xres = xres.reshape(N, Cout_k, Ho_pad * Wo)
        in_specs += [pl.BlockSpec((pl.Squeezed(), Cout_k, tile_h * Wo),
                                  lambda n, t: (n, 0, t))]
        args += [xres]

    out = pl.pallas_call(
        kernel_fn,
        out_shape=jax.ShapeDtypeStruct((N, Cout_k, Ho_pad * Wo), out_dtype),
        grid=(N, grid_t),
        in_specs=in_specs,
        out_specs=pl.BlockSpec((pl.Squeezed(), Cout_k, tile_h * Wo),
                               lambda n, t: (n, 0, t)),
        compiler_params=pltpu.CompilerParams(
            dimension_semantics=("parallel", "parallel"),
            vmem_limit_bytes=64 * 1024 * 1024),
    )(*args)

    out = out.reshape(N, Cout_k, Ho_pad, Wo)     # free: contiguous split
    if Cout_k > Cout or Ho_pad > Ho:
        out = out[:, :Cout, :Ho, :]
    return out


# --------------------------------------------------------------------------
# Pure-JAX f32 reference (module semantics, for correctness check)
# --------------------------------------------------------------------------
def fused_mbconv_reference(x_nchw, params, *, kernel, stride, eps):
    K, s = kernel, stride
    pad = (K - 1) // 2
    x = jnp.transpose(x_nchw, (0, 2, 3, 1)).astype(jnp.float32)
    dn = ("NHWC", "HWIO", "NHWC")
    y = jax.lax.conv_general_dilated(x, params["w1"], (s, s),
                                     ((pad, pad), (pad, pad)),
                                     dimension_numbers=dn)
    y = (y - params["m1"]) / jnp.sqrt(params["v1"] + eps) * params["g1"] + params["b1"]
    y = y * jax.nn.sigmoid(y)
    if "w2" in params:
        z = jax.lax.conv_general_dilated(y, params["w2"], (1, 1),
                                         ((0, 0), (0, 0)), dimension_numbers=dn)
        z = (z - params["m2"]) / jnp.sqrt(params["v2"] + eps) * params["g2"] + params["b2"]
    else:
        z = y
    if s == 1 and x.shape[-1] == z.shape[-1]:
        z = z + x                                  # residual, SD identity in eval
    return jnp.transpose(z, (0, 3, 1, 2))


# --------------------------------------------------------------------------
# Deterministic parameter construction + demo
# --------------------------------------------------------------------------
def make_params(key, Cin, Cexp, Cout, K, single_conv=False):
    ks = jax.random.split(key, 10)
    p = {
        # conv1: KxK, Cin -> Cexp (HWIO), no bias (BN follows)
        "w1": jax.random.normal(ks[0], (K, K, Cin, Cexp), jnp.float32) * 0.1,
        "g1": 1.0 + 0.1 * jax.random.normal(ks[1], (Cexp,), jnp.float32),
        "b1": 0.1 * jax.random.normal(ks[2], (Cexp,), jnp.float32),
        "m1": 0.1 * jax.random.normal(ks[3], (Cexp,), jnp.float32),
        "v1": jnp.abs(jax.random.normal(ks[4], (Cexp,), jnp.float32)) + 0.5,
    }
    if single_conv:
        assert Cexp == Cout
    else:
        p.update({
            # conv2: 1x1, Cexp -> Cout
            "w2": jax.random.normal(ks[5], (1, 1, Cexp, Cout), jnp.float32) * 0.1,
            "g2": 1.0 + 0.1 * jax.random.normal(ks[6], (Cout,), jnp.float32),
            "b2": 0.1 * jax.random.normal(ks[7], (Cout,), jnp.float32),
            "m2": 0.1 * jax.random.normal(ks[8], (Cout,), jnp.float32),
            "v2": jnp.abs(jax.random.normal(ks[9], (Cout,), jnp.float32)) + 0.5,
        })
    return p


if __name__ == "__main__":
    eps = 1e-3       # torchvision efficientnet_v2 uses BatchNorm2d(eps=1e-3)
    key = jax.random.PRNGKey(0)

    # (name, N, Cin, H, W, K, stride, Cexp, Cout, single_conv)
    tests = [
        # expand_ratio=4, k3, s1, 4->4  -> expanded=16, residual on
        ("expand4_s1_res", 2, 4, 16, 16, 3, 1, 16, 4, False),
        # expand_ratio=4, k3, s2, 4->8  -> downsampling block, no residual
        ("expand4_s2",     2, 4, 16, 16, 3, 2, 16, 8, False),
        # expand_ratio=1, k3, s1, 8->8  -> single fused conv, residual on
        ("expand1_s1_res", 2, 8, 16, 16, 3, 1, 8, 8, True),
    ]

    for name, N, Cin, H, W, K, s, Cexp, Cout, single in tests:
        key, kx, kp = jax.random.split(key, 3)
        x = jax.random.normal(kx, (N, Cin, H, W), jnp.float32)   # NCHW like PyTorch
        params = make_params(kp, Cin, Cexp, Cout, K, single_conv=single)

        out = fused_mbconv_forward(x, params, kernel=K, stride=s, eps=eps)
        out = jax.block_until_ready(out)
        ref = fused_mbconv_reference(x, params, kernel=K, stride=s, eps=eps)
        ref = jax.block_until_ready(ref)

        assert out.shape == ref.shape, (name, out.shape, ref.shape)
        # bf16 matmul inputs + bf16 output vs pure-f32 reference -> use a
        # scale-normalized error metric.
        err = jnp.max(jnp.abs(out.astype(jnp.float32) - ref) /
                      (1.0 + jnp.abs(ref)))
        assert float(err) < 5e-2, (name, float(err))

    print("KERNEL_OK")
</pallas_src>

<mosaic_0001>
module attributes {stable_mosaic.version = 11 : i64} {
  func.func @_fused_mbconv_kernel(%arg0: i32, %arg1: i32, %arg2: memref<1x1x1x18x18x4xbf16, #tpu.memory_space<vmem>>, %arg3: memref<36x16xbf16, #tpu.memory_space<vmem>>, %arg4: memref<1x16xf32, #tpu.memory_space<vmem>>, %arg5: memref<16x8xbf16, #tpu.memory_space<vmem>>, %arg6: memref<1x8xf32, #tpu.memory_space<vmem>>, %arg7: memref<1x8x256xf32, #tpu.memory_space<vmem>>, %arg8: memref<1x8x256xbf16, #tpu.memory_space<vmem>>) attributes {dimension_semantics = [#tpu.dimension_semantics<parallel>, #tpu.dimension_semantics<parallel>], iteration_bounds = array<i64: 2, 1>, scalar_prefetch = 0 : i64, scratch_operands = 0 : i64, tpu.core_type = #tpu.core_type<tc>, window_params = [{transform_indices = @transform_0, window_bounds = array<i64: 1, 1, 1, 18, 18, 4>}, {pipeline_mode = #tpu.pipeline_mode<synchronous>, transform_indices = @transform_1, window_bounds = array<i64: 36, 16>}, {pipeline_mode = #tpu.pipeline_mode<synchronous>, transform_indices = @transform_2, window_bounds = array<i64: 1, 16>}, {pipeline_mode = #tpu.pipeline_mode<synchronous>, transform_indices = @transform_3, window_bounds = array<i64: 16, 8>}, {pipeline_mode = #tpu.pipeline_mode<synchronous>, transform_indices = @transform_4, window_bounds = array<i64: 1, 8>}, {transform_indices = @transform_5, window_bounds = array<i64: 1, 8, 256>}, {transform_indices = @transform_6, window_bounds = array<i64: 1, 8, 256>}]} {
    %c16_i32 = arith.constant 16 : i32
    %0 = arith.muli %arg1, %c16_i32 : i32
    %1 = tpu.assume_multiple %0, 16 : i32
    %c0_i32 = arith.constant 0 : i32
    %2 = arith.addi %1, %c0_i32 : i32
    %c0 = arith.constant 0 : index
    %c0_0 = arith.constant 0 : index
    %c0_1 = arith.constant 0 : index
    %3 = arith.index_cast %2 : i32 to index
    %c0_2 = arith.constant 0 : index
    %c0_3 = arith.constant 0 : index
    %4 = vector.load %arg2[%c0, %c0_0, %c0_1, %3, %c0_2, %c0_3] : memref<1x1x1x18x18x4xbf16, #tpu.memory_space<vmem>>, vector<1x1x1x16x16x4xbf16>
    %5 = vector.shape_cast %4 : vector<1x1x1x16x16x4xbf16> to vector<16x16x4xbf16>
    %c0_i32_4 = arith.constant 0 : i32
    %6 = arith.addi %1, %c0_i32_4 : i32
    %c0_5 = arith.constant 0 : index
    %c0_6 = arith.constant 0 : index
    %c0_7 = arith.constant 0 : index
    %7 = arith.index_cast %6 : i32 to index
    %c1 = arith.constant 1 : index
    %c0_8 = arith.constant 0 : index
    %8 = vector.load %arg2[%c0_5, %c0_6, %c0_7, %7, %c1, %c0_8] : memref<1x1x1x18x18x4xbf16, #tpu.memory_space<vmem>>, vector<1x1x1x16x16x4xbf16>
    %9 = vector.shape_cast %8 : vector<1x1x1x16x16x4xbf16> to vector<16x16x4xbf16>
    %c0_i32_9 = arith.constant 0 : i32
    %10 = arith.addi %1, %c0_i32_9 : i32
    %c0_10 = arith.constant 0 : index
    %c0_11 = arith.constant 0 : index
    %c0_12 = arith.constant 0 : index
    %11 = arith.index_cast %10 : i32 to index
    %c2 = arith.constant 2 : index
    %c0_13 = arith.constant 0 : index
    %12 = vector.load %arg2[%c0_10, %c0_11, %c0_12, %11, %c2, %c0_13] : memref<1x1x1x18x18x4xbf16, #tpu.memory_space<vmem>>, vector<1x1x1x16x16x4xbf16>
    %13 = vector.shape_cast %12 : vector<1x1x1x16x16x4xbf16> to vector<16x16x4xbf16>
    %c1_i32 = arith.constant 1 : i32
    %14 = arith.addi %1, %c1_i32 : i32
    %c0_14 = arith.constant 0 : index
    %c0_15 = arith.constant 0 : index
    %c0_16 = arith.constant 0 : index
    %15 = arith.index_cast %14 : i32 to index
    %c0_17 = arith.constant 0 : index
    %c0_18 = arith.constant 0 : index
    %16 = vector.load %arg2[%c0_14, %c0_15, %c0_16, %15, %c0_17, %c0_18] : memref<1x1x1x18x18x4xbf16, #tpu.memory_space<vmem>>, vector<1x1x1x16x16x4xbf16>
    %17 = vector.shape_cast %16 : vector<1x1x1x16x16x4xbf16> to vector<16x16x4xbf16>
    %c1_i32_19 = arith.constant 1 : i32
    %18 = arith.addi %1, %c1_i32_19 : i32
    %c0_20 = arith.constant 0 : index
    %c0_21 = arith.constant 0 : index
    %c0_22 = arith.constant 0 : index
    %19 = arith.index_cast %18 : i32 to index
    %c1_23 = arith.constant 1 : index
    %c0_24 = arith.constant 0 : index
    %20 = vector.load %arg2[%c0_20, %c0_21, %c0_22, %19, %c1_23, %c0_24] : memref<1x1x1x18x18x4xbf16, #tpu.memory_space<vmem>>, vector<1x1x1x16x16x4xbf16>
    %21 = vector.shape_cast %20 : vector<1x1x1x16x16x4xbf16> to vector<16x16x4xbf16>
    %c1_i32_25 = arith.constant 1 : i32
    %22 = arith.addi %1, %c1_i32_25 : i32
    %c0_26 = arith.constant 0 : index
    %c0_27 = arith.constant 0 : index
    %c0_28 = arith.constant 0 : index
    %23 = arith.index_cast %22 : i32 to index
    %c2_29 = arith.constant 2 : index
    %c0_30 = arith.constant 0 : index
    %24 = vector.load %arg2[%c0_26, %c0_27, %c0_28, %23, %c2_29, %c0_30] : memref<1x1x1x18x18x4xbf16, #tpu.memory_space<vmem>>, vector<1x1x1x16x16x4xbf16>
    %25 = vector.shape_cast %24 : vector<1x1x1x16x16x4xbf16> to vector<16x16x4xbf16>
    %c2_i32 = arith.constant 2 : i32
    %26 = arith.addi %1, %c2_i32 : i32
    %c0_31 = arith.constant 0 : index
    %c0_32 = arith.constant 0 : index
    %c0_33 = arith.constant 0 : index
    %27 = arith.index_cast %26 : i32 to index
    %c0_34 = arith.constant 0 : index
    %c0_35 = arith.constant 0 : index
    %28 = vector.load %arg2[%c0_31, %c0_32, %c0_33, %27, %c0_34, %c0_35] : memref<1x1x1x18x18x4xbf16, #tpu.memory_space<vmem>>, vector<1x1x1x16x16x4xbf16>
    %29 = vector.shape_cast %28 : vector<1x1x1x16x16x4xbf16> to vector<16x16x4xbf16>
    %c2_i32_36 = arith.constant 2 : i32
    %30 = arith.addi %1, %c2_i32_36 : i32
    %c0_37 = arith.constant 0 : index
    %c0_38 = arith.constant 0 : index
    %c0_39 = arith.constant 0 : index
    %31 = arith.index_cast %30 : i32 to index
    %c1_40 = arith.constant 1 : index
    %c0_41 = arith.constant 0 : index
    %32 = vector.load %arg2[%c0_37, %c0_38, %c0_39, %31, %c1_40, %c0_41] : memref<1x1x1x18x18x4xbf16, #tpu.memory_space<vmem>>, vector<1x1x1x16x16x4xbf16>
    %33 = vector.shape_cast %32 : vector<1x1x1x16x16x4xbf16> to vector<16x16x4xbf16>
    %c2_i32_42 = arith.constant 2 : i32
    %34 = arith.addi %1, %c2_i32_42 : i32
    %c0_43 = arith.constant 0 : index
    %c0_44 = arith.constant 0 : index
    %c0_45 = arith.constant 0 : index
    %35 = arith.index_cast %34 : i32 to index
    %c2_46 = arith.constant 2 : index
    %c0_47 = arith.constant 0 : index
    %36 = vector.load %arg2[%c0_43, %c0_44, %c0_45, %35, %c2_46, %c0_47] : memref<1x1x1x18x18x4xbf16, #tpu.memory_space<vmem>>, vector<1x1x1x16x16x4xbf16>
    %37 = vector.shape_cast %36 : vector<1x1x1x16x16x4xbf16> to vector<16x16x4xbf16>
    %38 = tpu.concatenate %5, %9, %13, %17, %21, %25, %29, %33, %37 in 2 : vector<16x16x4xbf16>, vector<16x16x4xbf16>, vector<16x16x4xbf16>, vector<16x16x4xbf16>, vector<16x16x4xbf16>, vector<16x16x4xbf16>, vector<16x16x4xbf16>, vector<16x16x4xbf16>, vector<16x16x4xbf16> -> vector<16x16x36xbf16>
    %39 = vector.shape_cast %38 : vector<16x16x36xbf16> to vector<256x36xbf16>
    %c0_48 = arith.constant 0 : index
    %c0_49 = arith.constant 0 : index
    %40 = vector.load %arg3[%c0_48, %c0_49] : memref<36x16xbf16, #tpu.memory_space<vmem>>, vector<36x16xbf16>
    %cst = arith.constant dense<0.000000e+00> : vector<256x16xf32>
    %41 = tpu.matmul %39, %40, %cst {dimension_numbers = #tpu.dot_dimension_numbers<[1], [0], [0], [1], [0, 0, 1, 1], [], []>} : vector<256x36xbf16>, vector<36x16xbf16>, vector<256x16xf32> -> vector<256x16xf32>
    %c0_50 = arith.constant 0 : index
    %c0_51 = arith.constant 0 : index
    %42 = vector.load %arg4[%c0_50, %c0_51] : memref<1x16xf32, #tpu.memory_space<vmem>>, vector<1x16xf32>
    %43 = vector.broadcast %42 : vector<1x16xf32> to vector<256x16xf32>
    %44 = arith.addf %41, %43 : vector<256x16xf32>
    %45 = arith.truncf %44 : vector<256x16xf32> to vector<256x16xbf16>
    %46 = arith.negf %45 : vector<256x16xbf16>
    %47 = math.exp %46 : vector<256x16xbf16>
    %cst_52 = arith.constant 1.000000e+00 : bf16
    %48 = vector.broadcast %cst_52 : bf16 to vector<256x16xbf16>
    %49 = arith.addf %48, %47 : vector<256x16xbf16>
    %50 = arith.divf %48, %49 : vector<256x16xbf16>
    %51 = arith.extf %50 : vector<256x16xbf16> to vector<256x16xf32>
    %52 = arith.mulf %44, %51 : vector<256x16xf32>
    %53 = arith.truncf %52 : vector<256x16xf32> to vector<256x16xbf16>
    %c0_53 = arith.constant 0 : index
    %c0_54 = arith.constant 0 : index
    %54 = vector.load %arg5[%c0_53, %c0_54] : memref<16x8xbf16, #tpu.memory_space<vmem>>, vector<16x8xbf16>
    %cst_55 = arith.constant dense<0.000000e+00> : vector<256x8xf32>
    %55 = tpu.matmul %53, %54, %cst_55 {dimension_numbers = #tpu.dot_dimension_numbers<[1], [0], [0], [1], [0, 0, 1, 1], [], []>} : vector<256x16xbf16>, vector<16x8xbf16>, vector<256x8xf32> -> vector<256x8xf32>
    %c0_56 = arith.constant 0 : index
    %c0_57 = arith.constant 0 : index
    %56 = vector.load %arg6[%c0_56, %c0_57] : memref<1x8xf32, #tpu.memory_space<vmem>>, vector<1x8xf32>
    %57 = vector.broadcast %56 : vector<1x8xf32> to vector<256x8xf32>
    %58 = arith.addf %55, %57 : vector<256x8xf32>
    %59 = tpu.transpose %58, [1, 0] : vector<256x8xf32> -> vector<8x256xf32>
    %c0_58 = arith.constant 0 : index
    %c0_59 = arith.constant 0 : index
    %c0_60 = arith.constant 0 : index
    %60 = vector.load %arg7[%c0_58, %c0_59, %c0_60] : memref<1x8x256xf32, #tpu.memory_space<vmem>>, vector<1x8x256xf32>
    %61 = vector.shape_cast %60 : vector<1x8x256xf32> to vector<8x256xf32>
    %62 = arith.addf %59, %61 : vector<8x256xf32>
    %63 = arith.truncf %62 : vector<8x256xf32> to vector<8x256xbf16>
    %c0_61 = arith.constant 0 : index
    %c0_62 = arith.constant 0 : index
    %c0_63 = arith.constant 0 : index
    %64 = vector.load %arg8[%c0_61, %c0_62, %c0_63] : memref<1x8x256xbf16, #tpu.memory_space<vmem>>, vector<1x8x256xbf16>
    %65 = vector.shape_cast %64 : vector<1x8x256xbf16> to vector<8x256xbf16>
    %66 = vector.shape_cast %63 : vector<8x256xbf16> to vector<1x8x256xbf16>
    tpu.vector_store %arg8[%c0_61, %c0_62, %c0_63], %66 {strides = array<i32>} : memref<1x8x256xbf16, #tpu.memory_space<vmem>>, vector<1x8x256xbf16>,
    return
  }
  func.func @transform_0(%arg0: i32, %arg1: i32) -> (i32, i32, i32, i32, i32, i32) {
    %c0_i32 = arith.constant 0 : i32
    %c0_i32_0 = arith.constant 0 : i32
    %c0_i32_1 = arith.constant 0 : i32
    %c0_i32_2 = arith.constant 0 : i32
    %c0_i32_3 = arith.constant 0 : i32
    %c0_i32_4 = arith.constant 0 : i32
    return %arg0, %c0_i32, %c0_i32_0, %c0_i32_1, %c0_i32_2, %c0_i32_3 : i32, i32, i32, i32, i32, i32
  }
  func.func @transform_1(%arg0: i32, %arg1: i32) -> (i32, i32) {
    %c0_i32 = arith.constant 0 : i32
    %c0_i32_0 = arith.constant 0 : i32
    %c0_i32_1 = arith.constant 0 : i32
    return %c0_i32, %c0_i32_0 : i32, i32
  }
  func.func @transform_2(%arg0: i32, %arg1: i32) -> (i32, i32) {
    %c0_i32 = arith.constant 0 : i32
    %c0_i32_0 = arith.constant 0 : i32
    %c0_i32_1 = arith.constant 0 : i32
    return %c0_i32, %c0_i32_0 : i32, i32
  }
  func.func @transform_3(%arg0: i32, %arg1: i32) -> (i32, i32) {
    %c0_i32 = arith.constant 0 : i32
    %c0_i32_0 = arith.constant 0 : i32
    %c0_i32_1 = arith.constant 0 : i32
    return %c0_i32, %c0_i32_0 : i32, i32
  }
  func.func @transform_4(%arg0: i32, %arg1: i32) -> (i32, i32) {
    %c0_i32 = arith.constant 0 : i32
    %c0_i32_0 = arith.constant 0 : i32
    %c0_i32_1 = arith.constant 0 : i32
    return %c0_i32, %c0_i32_0 : i32, i32
  }
  func.func @transform_5(%arg0: i32, %arg1: i32) -> (i32, i32, i32) {
    %c0_i32 = arith.constant 0 : i32
    %c0_i32_0 = arith.constant 0 : i32
    return %arg0, %c0_i32, %arg1 : i32, i32, i32
  }
  func.func @transform_6(%arg0: i32, %arg1: i32) -> (i32, i32, i32) {
    %c0_i32 = arith.constant 0 : i32
    %c0_i32_0 = arith.constant 0 : i32
    return %arg0, %c0_i32, %arg1 : i32, i32, i32
  }
}

</mosaic_0001>

<llo_original>
// kernel: tpu_custom_call.1
$region0: #{tpu_custom_call.1}
  #allocation0 [shape = 'u32[]', space=smem, size = 0x4, offset = 0x4, fixed_abs, tag = 'smem constant byte address 0x4 - core index']
  #allocation1 [shape = 'u32[144,128]{1,0:T(1,128)}', space=vmem, size = 0x12000, scoped, tag = 'internal scratch']
  %s0 = inlined_call_operand.hbm [shape: bf16[2,1,1,18,18,4], index: 0, kind: input, shape index: {}]
  %s1 = inlined_call_operand.hbm [shape: bf16[36,16], index: 1, kind: input, shape index: {}]
  %s2 = inlined_call_operand.hbm [shape: f32[1,16], index: 2, kind: input, shape index: {}]
  %s3 = inlined_call_operand.hbm [shape: bf16[16,8], index: 3, kind: input, shape index: {}]
  %s4 = inlined_call_operand.hbm [shape: f32[1,8], index: 4, kind: input, shape index: {}]
  %s5 = inlined_call_operand.hbm [shape: f32[2,8,256], index: 5, kind: input, shape index: {}]
  %s6 = inlined_call_operand.hbm [shape: bf16[2,8,256], index: 6, kind: output, shape index: {}]
  %s7 = sld [smem:[#allocation0]]
  $region81: #{tpu_custom_call.1} parent=0
    _
  %s9 = ssub.s32 1, %s7
  %s10 = scalar_select 0, %s9, %s7
  $region1: #{tpu_custom_call.1} parent=0
    #allocation2 [shape = 'u8[221184]{0}', space=vmem, size = 0x36000, scoped, tag = 'input window, operand 0']
    #allocation3 [shape = 's32[2]{0}', space=sflag, size = 0x8, scoped, tag = 'scoped memory for tpu_custom_call.1']
    #allocation4 [shape = 's32[2]{0}', space=sflag, size = 0x8, scoped, tag = 'scoped memory for tpu_custom_call.1']
    #allocation5 [shape = 'u8[10240]{0}', space=vmem, size = 0x2800, scoped, tag = 'input window, operand 1, single buffered']
    #allocation6 [shape = 's32[1]{0}', space=sflag, size = 0x4, scoped, tag = 'scoped memory for tpu_custom_call.1']
    #allocation7 [shape = 'u8[512]{0}', space=vmem, size = 0x400, scoped, tag = 'input window, operand 2, single buffered']
    #allocation8 [shape = 'u8[4096]{0}', space=vmem, size = 0x1000, scoped, tag = 'input window, operand 3, single buffered']
    #allocation9 [shape = 's32[1]{0}', space=sflag, size = 0x4, scoped, tag = 'scoped memory for tpu_custom_call.1']
    #allocation10 [shape = 'u8[512]{0}', space=vmem, size = 0x400, scoped, tag = 'input window, operand 4, single buffered']
    #allocation11 [shape = 'u8[16384]{0}', space=vmem, size = 0x4000, scoped, tag = 'input window, operand 5']
    #allocation12 [shape = 's32[2]{0}', space=sflag, size = 0x8, scoped, tag = 'scoped memory for tpu_custom_call.1']
    #allocation13 [shape = 'u8[8192]{0}', space=vmem, size = 0x2000, scoped, tag = 'output window, operand 0']
    %11 = vsyncpa [#allocation3], 0
    %s12 = scalar_lea.sflag [#allocation3], 1
    %13 = vsyncpa %s12, 0
    %14 = vsyncpa [#allocation6], 0
    %15 = vsyncpa [#allocation9], 0
    %16 = vsyncpa [#allocation12], 0
    %s17 = scalar_lea.sflag [#allocation12], 1
    %18 = vsyncpa %s17, 0
    %19 = vsyncpa [#allocation4], 0
    %s20 = scalar_lea.sflag [#allocation4], 1
    %21 = vsyncpa %s20, 0
    loop: start=0, step=1, limit=4
    $region2: #{tpu_custom_call.1} parent=1 // loop_pre_header
      _
    $region3: #{tpu_custom_call.1} parent=1 // loop_header
      %s23 = sphi 0, %s27
      %p24 = scmp.ge.s32.totalorder %s23, 4
      %s30 = sphi 0, %s42
      %s31 = sphi 0, %s38
      %s32 = sphi 0, %s30
      %s33 = sphi 0, %s31
      %s34 = sphi 0, %s32
      %s35 = sphi 0, %s33
      %s45 = sphi 0, %s47
      %s48 = sphi 0, %s45
      %s49 = sphi 0, %s48
      %s65 = sphi 0, %s49
      %s69 = sphi 0, %s69
      %s71 = sphi 0, %s69
      %s72 = sphi 0, %s71
      %s86 = sphi 0, %s72
      %s90 = sphi 0, %s90
      %s92 = sphi 0, %s90
      %s93 = sphi 0, %s92
      %s107 = sphi 0, %s93
      %s111 = sphi 0, %s111
      %s113 = sphi 0, %s111
      %s114 = sphi 0, %s113
      %s128 = sphi 0, %s114
      %s132 = sphi 0, %s132
      %s134 = sphi 0, %s132
      %s135 = sphi 0, %s134
      %s149 = sphi 0, %s135
      %s157 = sphi 0, %s159
      %s160 = sphi 0, %s157
      %s161 = sphi 0, %s160
      %s177 = sphi 0, %s161
      %s185 = sphi 0, %s187
      %s188 = sphi 0, %s185
      %s189 = sphi 0, %s188
      %s205 = sphi 0, %s189
    $region4: #{tpu_custom_call.1} parent=1 // loop_header_branch
      %26 = sbr.rel (%p24) target = $region8
    $region5: #{tpu_custom_call.1} parent=1 // loop_body
      %s28 = ssub.s32 %s23, 1
      %s29 = ssub.s32 %s23, 2
      %s36 = sadd.s32 1, %s31
      %p37 = scmp.ge.s32.totalorder %s36, 1
      %s38 = scalar_select %p37, 0, %s36
      %s39 = sadd.s32 1, %s30
      %s40 = scalar_select %p37, %s39, %s30
      %p41 = scmp.ge.s32.totalorder %s40, 2
      %s42 = scalar_select %p41, 0, %s40
      %s43 = ssub.s32 %s30, %s42
      %p44 = scmp.eq.s32.totalorder %s43, 0
      %s46 = sadd.s32 %s45, 1
      %s47 = scalar_select %p44, %s45, %s46
      %p50 = pneg %p44
      %p51 = scmp.eq.s32.totalorder %s23, 1
      %p52 = por %p50, %p51
      %p53 = scmp.ne.s32.totalorder %s45, %s48
      %p54 = scmp.eq.s32.totalorder %s23, 0
      %p55 = por %p53, %p54
      %p56 = scmp.ne.s32.totalorder %s45, %s48
      %p57 = scmp.eq.s32.totalorder %s28, 1
      %p58 = por %p56, %p57
      %p59 = scmp.ne.s32.totalorder %s48, %s49
      %p60 = scmp.eq.s32.totalorder %s28, 0
      %p61 = por %p59, %p60
      %p62 = scmp.ne.s32.totalorder %s48, %s49
      %p63 = scmp.eq.s32.totalorder %s29, 1
      %p64 = por %p62, %p63
      %p66 = scmp.ne.s32.totalorder %s49, %s65
      %p67 = scmp.eq.s32.totalorder %s29, 0
      %p68 = por %p66, %p67
      %s70 = sadd.s32 %s69, 1
      %p73 = scmp.eq.s32.totalorder %s23, 1
      %p74 = scmp.ne.s32.totalorder %s69, %s71
      %p75 = scmp.eq.s32.totalorder %s23, 0
      %p76 = por %p74, %p75
      %p77 = scmp.ne.s32.totalorder %s69, %s71
      %p78 = scmp.eq.s32.totalorder %s28, 1
      %p79 = por %p77, %p78
      %p80 = scmp.ne.s32.totalorder %s71, %s72
      %p81 = scmp.eq.s32.totalorder %s28, 0
      %p82 = por %p80, %p81
      %p83 = scmp.ne.s32.totalorder %s71, %s72
      %p84 = scmp.eq.s32.totalorder %s29, 1
      %p85 = por %p83, %p84
      %p87 = scmp.ne.s32.totalorder %s72, %s86
      %p88 = scmp.eq.s32.totalorder %s29, 0
      %p89 = por %p87, %p88
      %s91 = sadd.s32 %s90, 1
      %p94 = scmp.eq.s32.totalorder %s23, 1
      %p95 = scmp.ne.s32.totalorder %s90, %s92
      %p96 = scmp.eq.s32.totalorder %s23, 0
      %p97 = por %p95, %p96
      %p98 = scmp.ne.s32.totalorder %s90, %s92
      %p99 = scmp.eq.s32.totalorder %s28, 1
      %p100 = por %p98, %p99
      %p101 = scmp.ne.s32.totalorder %s92, %s93
      %p102 = scmp.eq.s32.totalorder %s28, 0
      %p103 = por %p101, %p102
      %p104 = scmp.ne.s32.totalorder %s92, %s93
      %p105 = scmp.eq.s32.totalorder %s29, 1
      %p106 = por %p104, %p105
      %p108 = scmp.ne.s32.totalorder %s93, %s107
      %p109 = scmp.eq.s32.totalorder %s29, 0
      %p110 = por %p108, %p109
      %s112 = sadd.s32 %s111, 1
      %p115 = scmp.eq.s32.totalorder %s23, 1
      %p116 = scmp.ne.s32.totalorder %s111, %s113
      %p117 = scmp.eq.s32.totalorder %s23, 0
      %p118 = por %p116, %p117
      %p119 = scmp.ne.s32.totalorder %s111, %s113
      %p120 = scmp.eq.s32.totalorder %s28, 1
      %p121 = por %p119, %p120
      %p122 = scmp.ne.s32.totalorder %s113, %s114
      %p123 = scmp.eq.s32.totalorder %s28, 0
      %p124 = por %p122, %p123
      %p125 = scmp.ne.s32.totalorder %s113, %s114
      %p126 = scmp.eq.s32.totalorder %s29, 1
      %p127 = por %p125, %p126
      %p129 = scmp.ne.s32.totalorder %s114, %s128
      %p130 = scmp.eq.s32.totalorder %s29, 0
      %p131 = por %p129, %p130
      %s133 = sadd.s32 %s132, 1
      %p136 = scmp.eq.s32.totalorder %s23, 1
      %p137 = scmp.ne.s32.totalorder %s132, %s134
      %p138 = scmp.eq.s32.totalorder %s23, 0
      %p139 = por %p137, %p138
      %p140 = scmp.ne.s32.totalorder %s132, %s134
      %p141 = scmp.eq.s32.totalorder %s28, 1
      %p142 = por %p140, %p141
      %p143 = scmp.ne.s32.totalorder %s134, %s135
      %p144 = scmp.eq.s32.totalorder %s28, 0
      %p145 = por %p143, %p144
      %p146 = scmp.ne.s32.totalorder %s134, %s135
      %p147 = scmp.eq.s32.totalorder %s29, 1
      %p148 = por %p146, %p147
      %p150 = scmp.ne.s32.totalorder %s135, %s149
      %p151 = scmp.eq.s32.totalorder %s29, 0
      %p152 = por %p150, %p151
      %s153 = ssub.s32 %s30, %s42
      %s154 = ssub.s32 %s31, %s38
      %s155 = sor.u32 %s153, %s154
      %p156 = scmp.eq.s32.totalorder %s155, 0
      %s158 = sadd.s32 %s157, 1
      %s159 = scalar_select %p156, %s157, %s158
      %p162 = pneg %p156
      %p163 = scmp.eq.s32.totalorder %s23, 1
      %p164 = por %p162, %p163
      %p165 = scmp.ne.s32.totalorder %s157, %s160
      %p166 = scmp.eq.s32.totalorder %s23, 0
      %p167 = por %p165, %p166
      %p168 = scmp.ne.s32.totalorder %s157, %s160
      %p169 = scmp.eq.s32.totalorder %s28, 1
      %p170 = por %p168, %p169
      %p171 = scmp.ne.s32.totalorder %s160, %s161
      %p172 = scmp.eq.s32.totalorder %s28, 0
      %p173 = por %p171, %p172
      %p174 = scmp.ne.s32.totalorder %s160, %s161
      %p175 = scmp.eq.s32.totalorder %s29, 1
      %p176 = por %p174, %p175
      %p178 = scmp.ne.s32.totalorder %s161, %s177
      %p179 = scmp.eq.s32.totalorder %s29, 0
      %p180 = por %p178, %p179
      %s181 = ssub.s32 %s30, %s42
      %s182 = ssub.s32 %s31, %s38
      %s183 = sor.u32 %s181, %s182
      %p184 = scmp.eq.s32.totalorder %s183, 0
      %s186 = sadd.s32 %s185, 1
      %s187 = scalar_select %p184, %s185, %s186
      %p190 = pneg %p184
      %p191 = scmp.eq.s32.totalorder %s23, 1
      %p192 = por %p190, %p191
      %p193 = scmp.ne.s32.totalorder %s185, %s188
      %p194 = scmp.eq.s32.totalorder %s23, 0
      %p195 = por %p193, %p194
      %p196 = scmp.ne.s32.totalorder %s185, %s188
      %p197 = scmp.eq.s32.totalorder %s28, 1
      %p198 = por %p196, %p197
      %p199 = scmp.ne.s32.totalorder %s188, %s189
      %p200 = scmp.eq.s32.totalorder %s28, 0
      %p201 = por %p199, %p200
      %p202 = scmp.ne.s32.totalorder %s188, %s189
      %p203 = scmp.eq.s32.totalorder %s29, 1
      %p204 = por %p202, %p203
      %p206 = scmp.ne.s32.totalorder %s189, %s205
      %p207 = scmp.eq.s32.totalorder %s29, 0
      %p208 = por %p206, %p207
      %p209 = scmp.le.s32.totalorder 1, %s23
      %p210 = scmp.lt.s32.totalorder %s23, 3
      %p211 = pnand %p209, %p210
      %p212 = pneg %p211
      // Predicated region
      $region9: #{tpu_custom_call.1} parent=5 // pred_check
        _
      $region10: #{tpu_custom_call.1} parent=5 // pred_check_branch
        %214 = sbr.rel (%p211) target = $region12
      $region11: #{tpu_custom_call.1} parent=5 // pred_region
        %s215 = ssub.s32 %s23, 1
        // Predicated region
        $region13: #{tpu_custom_call.1} parent=11 // pred_check
          %p216 = pneg %p82
        $region14: #{tpu_custom_call.1} parent=11 // pred_check_branch
          %218 = sbr.rel (%p216) target = $region16
        $region15: #{tpu_custom_call.1} parent=11 // pred_region
          %s220 = ssub.s32 320, 320
          %221 = vsyncadd [#allocation6], %s220
          %s222 = sshll.u32 [#allocation5], 4
          %s223 = int_to_ptr.vmem [resolvable:$true] %s222
          %228 = dma.hbm_to_vmem [thread:$0]  %s1, 320, %s223, [#allocation6], 64, 64, 4
        $region16: #{tpu_custom_call.1} parent=11 // pred_fallthru
          _
        // Predicated region
        $region17: #{tpu_custom_call.1} parent=11 // pred_check
          %p229 = pneg %p103
        $region18: #{tpu_custom_call.1} parent=11 // pred_check_branch
          %231 = sbr.rel (%p229) target = $region20
        $region19: #{tpu_custom_call.1} parent=11 // pred_region
          %s233 = ssub.s32 16, 16
          %234 = vsyncadd [#allocation6], %s233
          %s236 = sshll.u32 [#allocation7], 4
          %s237 = int_to_ptr.vmem [resolvable:$true] %s236
          %239 = dma.hbm_to_vmem [thread:$0]  %s2, 16, %s237, [#allocation6]
        $region20: #{tpu_custom_call.1} parent=11 // pred_fallthru
          _
        // Predicated region
        $region21: #{tpu_custom_call.1} parent=11 // pred_check
          %p240 = pneg %p124
        $region22: #{tpu_custom_call.1} parent=11 // pred_check_branch
          %242 = sbr.rel (%p240) target = $region24
        $region23: #{tpu_custom_call.1} parent=11 // pred_region
          %s244 = ssub.s32 128, 128
          %245 = vsyncadd [#allocation9], %s244
          %s246 = sshll.u32 [#allocation8], 4
          %s247 = int_to_ptr.vmem [resolvable:$true] %s246
          %252 = dma.hbm_to_vmem [thread:$0]  %s3, 128, %s247, [#allocation9], 64, 64, 4
        $region24: #{tpu_custom_call.1} parent=11 // pred_fallthru
          _
        // Predicated region
        $region25: #{tpu_custom_call.1} parent=11 // pred_check
          %p253 = pneg %p145
        $region26: #{tpu_custom_call.1} parent=11 // pred_check_branch
          %255 = sbr.rel (%p253) target = $region28
        $region27: #{tpu_custom_call.1} parent=11 // pred_region
          %s257 = ssub.s32 16, 16
          %258 = vsyncadd [#allocation9], %s257
          %s260 = sshll.u32 [#allocation10], 4
          %s261 = int_to_ptr.vmem [resolvable:$true] %s260
          %263 = dma.hbm_to_vmem [thread:$0]  %s4, 16, %s261, [#allocation9]
        $region28: #{tpu_custom_call.1} parent=11 // pred_fallthru
          _
      $region12: #{tpu_custom_call.1} parent=5 // pred_fallthru
        _
      %p264 = scmp.lt.s32.totalorder %s23, 2
      // Predicated region
      $region29: #{tpu_custom_call.1} parent=5 // pred_check
        %p265 = pneg %p264
      $region30: #{tpu_custom_call.1} parent=5 // pred_check_branch
        %267 = sbr.rel (%p265) target = $region32
      $region31: #{tpu_custom_call.1} parent=5 // pred_region
        // Predicated region
        $region33: #{tpu_custom_call.1} parent=31 // pred_check
          %p268 = pneg %p55
        $region34: #{tpu_custom_call.1} parent=31 // pred_check_branch
          %270 = sbr.rel (%p268) target = $region36
        $region35: #{tpu_custom_call.1} parent=31 // pred_region
          %s271 = sand.u32 %s45, 1
          %s272 = scalar_lea.sflag [#allocation3], %s271
          %s273 = sand.u32 %s45, 1
          %s274 = smul.addr %s273, 216
          %s275 = scalar_lea.vmem [#allocation2], %s274
          %s277 = ssub.s32 3456, 3456
          %278 = vsyncadd %s272, %s277
          %s279 = smul.addr %s30, 54
          %s280 = smul.addr %s279, 64
          %s281 = scalar_lea.hbm %s0, %s280
          %s282 = sshll.u32 %s275, 4
          %s283 = int_to_ptr.vmem [resolvable:$true] %s282
          %288 = dma.hbm_to_vmem [thread:$0]  %s281, 3456, %s283, %s272, 64, 64, 4
        $region36: #{tpu_custom_call.1} parent=31 // pred_fallthru
          _
        // Predicated region
        $region37: #{tpu_custom_call.1} parent=31 // pred_check
          %p289 = pneg %p167
        $region38: #{tpu_custom_call.1} parent=31 // pred_check_branch
          %291 = sbr.rel (%p289) target = $region40
        $region39: #{tpu_custom_call.1} parent=31 // pred_region
          %s292 = sand.u32 %s157, 1
          %s293 = scalar_lea.sflag [#allocation12], %s292
          %s294 = sand.u32 %s157, 1
          %s295 = smul.addr %s294, 16
          %s296 = scalar_lea.vmem [#allocation11], %s295
          %s297 = smul.u32 2, %s31
          %s299 = ssub.s32 256, 256
          %300 = vsyncadd %s293, %s299
          %s301 = smul.addr %s30, 2
          %s302 = sadd.s32 %s297, %s301
          %s303 = smul.addr %s302, 128
          %s304 = scalar_lea.hbm %s5, %s303
          %s306 = sshll.u32 %s296, 4
          %s307 = int_to_ptr.vmem [resolvable:$true] %s306
          %309 = dma.hbm_to_vmem [thread:$0]  %s304, 256, %s307, %s293
        $region40: #{tpu_custom_call.1} parent=31 // pred_fallthru
          _
      $region32: #{tpu_custom_call.1} parent=5 // pred_fallthru
        _
      %p310 = scmp.le.s32.totalorder 1, %s23
      %p311 = scmp.lt.s32.totalorder %s23, 3
      %p312 = pnand %p310, %p311
      %p313 = pneg %p312
      // Predicated region
      $region41: #{tpu_custom_call.1} parent=5 // pred_check
        _
      $region42: #{tpu_custom_call.1} parent=5 // pred_check_branch
        %315 = sbr.rel (%p312) target = $region44
      $region43: #{tpu_custom_call.1} parent=5 // pred_region
        %s316 = ssub.s32 %s23, 1
        %s317 = sand.u32 %s48, 1
        %s318 = scalar_lea.sflag [#allocation3], %s317
        %s319 = sand.u32 %s48, 1
        %s320 = smul.addr %s319, 216
        %s321 = scalar_lea.vmem [#allocation2], %s320
        // Predicated region
        $region45: #{tpu_custom_call.1} parent=43 // pred_check
          %p322 = pneg %p61
        $region46: #{tpu_custom_call.1} parent=43 // pred_check_branch
          %324 = sbr.rel (%p322) target = $region48
        $region47: #{tpu_custom_call.1} parent=43 // pred_region
          %325 = dma.done %s318, 3456
        $region48: #{tpu_custom_call.1} parent=43 // pred_fallthru
          _
        // Predicated region
        $region49: #{tpu_custom_call.1} parent=43 // pred_check
          %p326 = pneg %p82
        $region50: #{tpu_custom_call.1} parent=43 // pred_check_branch
          %328 = sbr.rel (%p326) target = $region52
        $region51: #{tpu_custom_call.1} parent=43 // pred_region
          %329 = dma.done [#allocation6], 320
        $region52: #{tpu_custom_call.1} parent=43 // pred_fallthru
          _
        // Predicated region
        $region53: #{tpu_custom_call.1} parent=43 // pred_check
          %p330 = pneg %p103
        $region54: #{tpu_custom_call.1} parent=43 // pred_check_branch
          %332 = sbr.rel (%p330) target = $region56
        $region55: #{tpu_custom_call.1} parent=43 // pred_region
          %333 = dma.done [#allocation6], 16
        $region56: #{tpu_custom_call.1} parent=43 // pred_fallthru
          _
        // Predicated region
        $region57: #{tpu_custom_call.1} parent=43 // pred_check
          %p334 = pneg %p124
        $region58: #{tpu_custom_call.1} parent=43 // pred_check_branch
          %336 = sbr.rel (%p334) target = $region60
        $region59: #{tpu_custom_call.1} parent=43 // pred_region
          %337 = dma.done [#allocation9], 128
        $region60: #{tpu_custom_call.1} parent=43 // pred_fallthru
          _
        // Predicated region
        $region61: #{tpu_custom_call.1} parent=43 // pred_check
          %p338 = pneg %p145
        $region62: #{tpu_custom_call.1} parent=43 // pred_check_branch
          %340 = sbr.rel (%p338) target = $region64
        $region63: #{tpu_custom_call.1} parent=43 // pred_region
          %341 = dma.done [#allocation9], 16
        $region64: #{tpu_custom_call.1} parent=43 // pred_fallthru
          _
        %s342 = sand.u32 %s160, 1
        %s343 = scalar_lea.sflag [#allocation12], %s342
        %s344 = sand.u32 %s160, 1
        %s345 = smul.addr %s344, 16
        %s346 = scalar_lea.vmem [#allocation11], %s345
        // Predicated region
        $region65: #{tpu_custom_call.1} parent=43 // pred_check
          %p347 = pneg %p173
        $region66: #{tpu_custom_call.1} parent=43 // pred_check_branch
          %349 = sbr.rel (%p347) target = $region68
        $region67: #{tpu_custom_call.1} parent=43 // pred_region
          %350 = dma.done %s343, 256
        $region68: #{tpu_custom_call.1} parent=43 // pred_fallthru
          _
        %s351 = sand.u32 %s48, 1
        %s352 = scalar_lea.sflag [#allocation3], %s351
        %s353 = sand.u32 %s48, 1
        %s354 = smul.addr %s353, 216
        %s355 = scalar_lea.vmem [#allocation2], %s354
        %p356 = pneg %p61
        %p357 = pneg %p58
        %p358 = pneg %p82
        %p359 = pneg %p79
        %p360 = pneg %p103
        %p361 = pneg %p100
        %p362 = pneg %p124
        %p363 = pneg %p121
        %p364 = pneg %p145
        %p365 = pneg %p142
        %s366 = sand.u32 %s160, 1
        %s367 = scalar_lea.sflag [#allocation12], %s366
        %s368 = sand.u32 %s160, 1
        %s369 = smul.addr %s368, 16
        %s370 = scalar_lea.vmem [#allocation11], %s369
        %p371 = pneg %p173
        %p372 = pneg %p170
        %p373 = pneg %p201
        %p374 = pneg %p198
        %s375 = sand.u32 %s188, 1
        %s376 = scalar_lea.sflag [#allocation4], %s375
        %s377 = sand.u32 %s188, 1
        %s378 = smul.addr %s377, 8
        %s379 = scalar_lea.vmem [#allocation13], %s378
        %s380 = smul.u32 2, %s33
        %s381 = smul.u32 2, %s33
        %s384 = smul.u32 %s33, 16
        %s385 = smul.u32 %s384, 3
        %s386 = smul.addr %s385, 4
        %s387 = scalar_lea.vmem %s321, %s386 [#allocation2]
        %v388 = vld [vmem:[%s387] sm:$0xf]
        %v389 = vld [vmem:[%s387 + $0x4] sm:$0xf]
        %v390 = vld [vmem:[%s387 + $0xc] sm:$0xf]
        %v391 = vld [vmem:[%s387 + $0x10] sm:$0xf]
        %v392 = vld [vmem:[%s387 + $0x18] sm:$0xf]
        %v393 = vld [vmem:[%s387 + $0x1c] sm:$0xf]
        %v394 = vld [vmem:[%s387 + $0x24] sm:$0xf]
        %v395 = vld [vmem:[%s387 + $0x28] sm:$0xf]
        %v396 = vld [vmem:[%s387 + $0x30] sm:$0xf]
        %v397 = vld [vmem:[%s387 + $0x34] sm:$0xf]
        %v398 = vld [vmem:[%s387 + $0x3c] sm:$0xf]
        %v399 = vld [vmem:[%s387 + $0x40] sm:$0xf]
        %v400 = vld [vmem:[%s387 + $0x48] sm:$0xf]
        %v401 = vld [vmem:[%s387 + $0x4c] sm:$0xf]
        %v402 = vld [vmem:[%s387 + $0x54] sm:$0xf]
        %v403 = vld [vmem:[%s387 + $0x58] sm:$0xf]
        %v404 = vld [vmem:[%s387 + $0x60] sm:$0xf]
        %v405 = vld [vmem:[%s387 + $0x64] sm:$0xf]
        %v406 = vld [vmem:[%s387 + $0x6c] sm:$0xf]
        %v407 = vld [vmem:[%s387 + $0x70] sm:$0xf]
        %v408 = vld [vmem:[%s387 + $0x78] sm:$0xf]
        %v409 = vld [vmem:[%s387 + $0x7c] sm:$0xf]
        %v410 = vld [vmem:[%s387 + $0x84] sm:$0xf]
        %v411 = vld [vmem:[%s387 + $0x88] sm:$0xf]
        %v412 = vld [vmem:[%s387 + $0x90] sm:$0xf]
        %v413 = vld [vmem:[%s387 + $0x94] sm:$0xf]
        %v414 = vld [vmem:[%s387 + $0x9c] sm:$0xf]
        %v415 = vld [vmem:[%s387 + $0xa0] sm:$0xf]
        %v416 = vld [vmem:[%s387 + $0xa8] sm:$0xf]
        %v417 = vld [vmem:[%s387 + $0xac] sm:$0xf]
        %v418 = vld [vmem:[%s387 + $0xb4] sm:$0xf]
        %v419 = vld [vmem:[%s387 + $0xb8] sm:$0xf]
        %v420 = vld [vmem:[%s387 + $0x8] sm:$0x1]
        %v421 = vld [vmem:[%s387 + $0x14] sm:$0x1]
        %v422 = vld [vmem:[%s387 + $0x20] sm:$0x1]
        %v423 = vld [vmem:[%s387 + $0x2c] sm:$0x1]
        %v424 = vld [vmem:[%s387 + $0x38] sm:$0x1]
        %v425 = vld [vmem:[%s387 + $0x44] sm:$0x1]
        %v426 = vld [vmem:[%s387 + $0x50] sm:$0x1]
        %v427 = vld [vmem:[%s387 + $0x5c] sm:$0x1]
        %v428 = vld [vmem:[%s387 + $0x68] sm:$0x1]
        %v429 = vld [vmem:[%s387 + $0x74] sm:$0x1]
        %v430 = vld [vmem:[%s387 + $0x80] sm:$0x1]
        %v431 = vld [vmem:[%s387 + $0x8c] sm:$0x1]
        %v432 = vld [vmem:[%s387 + $0x98] sm:$0x1]
        %v433 = vld [vmem:[%s387 + $0xa4] sm:$0x1]
        %v434 = vld [vmem:[%s387 + $0xb0] sm:$0x1]
        %v435 = vld [vmem:[%s387 + $0xbc] sm:$0x1]
        %v436 = vld [vmem:[%s387] sm:$0xe]
        %v437 = vld [vmem:[%s387 + $0xc] sm:$0xe]
        %v438 = vld [vmem:[%s387 + $0x18] sm:$0xe]
        %v439 = vld [vmem:[%s387 + $0x24] sm:$0xe]
        %v440 = vld [vmem:[%s387 + $0x30] sm:$0xe]
        %v441 = vld [vmem:[%s387 + $0x3c] sm:$0xe]
        %v442 = vld [vmem:[%s387 + $0x48] sm:$0xe]
        %v443 = vld [vmem:[%s387 + $0x54] sm:$0xe]
        %v444 = vld [vmem:[%s387 + $0x60] sm:$0xe]
        %v445 = vld [vmem:[%s387 + $0x6c] sm:$0xe]
        %v446 = vld [vmem:[%s387 + $0x78] sm:$0xe]
        %v447 = vld [vmem:[%s387 + $0x84] sm:$0xe]
        %v448 = vld [vmem:[%s387 + $0x90] sm:$0xe]
        %v449 = vld [vmem:[%s387 + $0x9c] sm:$0xe]
        %v450 = vld [vmem:[%s387 + $0xa8] sm:$0xe]
        %v451 = vld [vmem:[%s387 + $0xb4] sm:$0xe]
        %s452 = sadd.s32 %s384, 1
        %s453 = smul.u32 %s452, 3
        %s454 = smul.addr %s453, 4
        %s455 = scalar_lea.vmem %s321, %s454 [#allocation2]
        %v456 = vld [vmem:[%s455] sm:$0xf]
        %v457 = vld [vmem:[%s455 + $0x4] sm:$0xf]
        %v458 = vld [vmem:[%s455 + $0xc] sm:$0xf]
        %v459 = vld [vmem:[%s455 + $0x10] sm:$0xf]
        %v460 = vld [vmem:[%s455 + $0x18] sm:$0xf]
        %v461 = vld [vmem:[%s455 + $0x1c] sm:$0xf]
        %v462 = vld [vmem:[%s455 + $0x24] sm:$0xf]
        %v463 = vld [vmem:[%s455 + $0x28] sm:$0xf]
        %v464 = vld [vmem:[%s455 + $0x30] sm:$0xf]
        %v465 = vld [vmem:[%s455 + $0x34] sm:$0xf]
        %v466 = vld [vmem:[%s455 + $0x3c] sm:$0xf]
        %v467 = vld [vmem:[%s455 + $0x40] sm:$0xf]
        %v468 = vld [vmem:[%s455 + $0x48] sm:$0xf]
        %v469 = vld [vmem:[%s455 + $0x4c] sm:$0xf]
        %v470 = vld [vmem:[%s455 + $0x54] sm:$0xf]
        %v471 = vld [vmem:[%s455 + $0x58] sm:$0xf]
        %v472 = vld [vmem:[%s455 + $0x60] sm:$0xf]
        %v473 = vld [vmem:[%s455 + $0x64] sm:$0xf]
        %v474 = vld [vmem:[%s455 + $0x6c] sm:$0xf]
        %v475 = vld [vmem:[%s455 + $0x70] sm:$0xf]
        %v476 = vld [vmem:[%s455 + $0x78] sm:$0xf]
        %v477 = vld [vmem:[%s455 + $0x7c] sm:$0xf]
        %v478 = vld [vmem:[%s455 + $0x84] sm:$0xf]
        %v479 = vld [vmem:[%s455 + $0x88] sm:$0xf]
        %v480 = vld [vmem:[%s455 + $0x90] sm:$0xf]
        %v481 = vld [vmem:[%s455 + $0x94] sm:$0xf]
        %v482 = vld [vmem:[%s455 + $0x9c] sm:$0xf]
        %v483 = vld [vmem:[%s455 + $0xa0] sm:$0xf]
        %v484 = vld [vmem:[%s455 + $0xa8] sm:$0xf]
        %v485 = vld [vmem:[%s455 + $0xac] sm:$0xf]
        %v486 = vld [vmem:[%s455 + $0xb4] sm:$0xf]
        %v487 = vld [vmem:[%s455 + $0xb8] sm:$0xf]
        %v488 = vld [vmem:[%s455 + $0x8] sm:$0x1]
        %v489 = vld [vmem:[%s455 + $0x14] sm:$0x1]
        %v490 = vld [vmem:[%s455 + $0x20] sm:$0x1]
        %v491 = vld [vmem:[%s455 + $0x2c] sm:$0x1]
        %v492 = vld [vmem:[%s455 + $0x38] sm:$0x1]
        %v493 = vld [vmem:[%s455 + $0x44] sm:$0x1]
        %v494 = vld [vmem:[%s455 + $0x50] sm:$0x1]
        %v495 = vld [vmem:[%s455 + $0x5c] sm:$0x1]
        %v496 = vld [vmem:[%s455 + $0x68] sm:$0x1]
        %v497 = vld [vmem:[%s455 + $0x74] sm:$0x1]
        %v498 = vld [vmem:[%s455 + $0x80] sm:$0x1]
        %v499 = vld [vmem:[%s455 + $0x8c] sm:$0x1]
        %v500 = vld [vmem:[%s455 + $0x98] sm:$0x1]
        %v501 = vld [vmem:[%s455 + $0xa4] sm:$0x1]
        %v502 = vld [vmem:[%s455 + $0xb0] sm:$0x1]
        %v503 = vld [vmem:[%s455 + $0xbc] sm:$0x1]
        %v504 = vld [vmem:[%s455] sm:$0xe]
        %v505 = vld [vmem:[%s455 + $0xc] sm:$0xe]
        %v506 = vld [vmem:[%s455 + $0x18] sm:$0xe]
        %v507 = vld [vmem:[%s455 + $0x24] sm:$0xe]
        %v508 = vld [vmem:[%s455 + $0x30] sm:$0xe]
        %v509 = vld [vmem:[%s455 + $0x3c] sm:$0xe]
        %v510 = vld [vmem:[%s455 + $0x48] sm:$0xe]
        %v511 = vld [vmem:[%s455 + $0x54] sm:$0xe]
        %v512 = vld [vmem:[%s455 + $0x60] sm:$0xe]
        %v513 = vld [vmem:[%s455 + $0x6c] sm:$0xe]
        %v514 = vld [vmem:[%s455 + $0x78] sm:$0xe]
        %v515 = vld [vmem:[%s455 + $0x84] sm:$0xe]
        %v516 = vld [vmem:[%s455 + $0x90] sm:$0xe]
        %v517 = vld [vmem:[%s455 + $0x9c] sm:$0xe]
        %v518 = vld [vmem:[%s455 + $0xa8] sm:$0xe]
        %v519 = vld [vmem:[%s455 + $0xb4] sm:$0xe]
        %s520 = sadd.s32 %s384, 2
        %s521 = smul.u32 %s520, 3
        %s522 = smul.addr %s521, 4
        %s523 = scalar_lea.vmem %s321, %s522 [#allocation2]
        %v524 = vld [vmem:[%s523] sm:$0xf]
        %v525 = vld [vmem:[%s523 + $0x4] sm:$0xf]
        %v526 = vld [vmem:[%s523 + $0xc] sm:$0xf]
        %v527 = vld [vmem:[%s523 + $0x10] sm:$0xf]
        %v528 = vld [vmem:[%s523 + $0x18] sm:$0xf]
        %v529 = vld [vmem:[%s523 + $0x1c] sm:$0xf]
        %v530 = vld [vmem:[%s523 + $0x24] sm:$0xf]
        %v531 = vld [vmem:[%s523 + $0x28] sm:$0xf]
        %v532 = vld [vmem:[%s523 + $0x30] sm:$0xf]
        %v533 = vld [vmem:[%s523 + $0x34] sm:$0xf]
        %v534 = vld [vmem:[%s523 + $0x3c] sm:$0xf]
        %v535 = vld [vmem:[%s523 + $0x40] sm:$0xf]
        %v536 = vld [vmem:[%s523 + $0x48] sm:$0xf]
        %v537 = vld [vmem:[%s523 + $0x4c] sm:$0xf]
        %v538 = vld [vmem:[%s523 + $0x54] sm:$0xf]
        %v539 = vld [vmem:[%s523 + $0x58] sm:$0xf]
        %v540 = vld [vmem:[%s523 + $0x60] sm:$0xf]
        %v541 = vld [vmem:[%s523 + $0x64] sm:$0xf]
        %v542 = vld [vmem:[%s523 + $0x6c] sm:$0xf]
        %v543 = vld [vmem:[%s523 + $0x70] sm:$0xf]
        %v544 = vld [vmem:[%s523 + $0x78] sm:$0xf]
        %v545 = vld [vmem:[%s523 + $0x7c] sm:$0xf]
        %v546 = vld [vmem:[%s523 + $0x84] sm:$0xf]
        %v547 = vld [vmem:[%s523 + $0x88] sm:$0xf]
        %v548 = vld [vmem:[%s523 + $0x90] sm:$0xf]
        %v549 = vld [vmem:[%s523 + $0x94] sm:$0xf]
        %v550 = vld [vmem:[%s523 + $0x9c] sm:$0xf]
        %v551 = vld [vmem:[%s523 + $0xa0] sm:$0xf]
        %v552 = vld [vmem:[%s523 + $0xa8] sm:$0xf]
        %v553 = vld [vmem:[%s523 + $0xac] sm:$0xf]
        %v554 = vld [vmem:[%s523 + $0xb4] sm:$0xf]
        %v555 = vld [vmem:[%s523 + $0xb8] sm:$0xf]
        %v556 = vld [vmem:[%s523 + $0x8] sm:$0x1]
        %v557 = vld [vmem:[%s523 + $0x14] sm:$0x1]
        %v558 = vld [vmem:[%s523 + $0x20] sm:$0x1]
        %v559 = vld [vmem:[%s523 + $0x2c] sm:$0x1]
        %v560 = vld [vmem:[%s523 + $0x38] sm:$0x1]
        %v561 = vld [vmem:[%s523 + $0x44] sm:$0x1]
        %v562 = vld [vmem:[%s523 + $0x50] sm:$0x1]
        %v563 = vld [vmem:[%s523 + $0x5c] sm:$0x1]
        %v564 = vld [vmem:[%s523 + $0x68] sm:$0x1]
        %v565 = vld [vmem:[%s523 + $0x74] sm:$0x1]
        %v566 = vld [vmem:[%s523 + $0x80] sm:$0x1]
        %v567 = vld [vmem:[%s523 + $0x8c] sm:$0x1]
        %v568 = vld [vmem:[%s523 + $0x98] sm:$0x1]
        %v569 = vld [vmem:[%s523 + $0xa4] sm:$0x1]
        %v570 = vld [vmem:[%s523 + $0xb0] sm:$0x1]
        %v571 = vld [vmem:[%s523 + $0xbc] sm:$0x1]
        %v572 = vld [vmem:[%s523] sm:$0xe]
        %v573 = vld [vmem:[%s523 + $0xc] sm:$0xe]
        %v574 = vld [vmem:[%s523 + $0x18] sm:$0xe]
        %v575 = vld [vmem:[%s523 + $0x24] sm:$0xe]
        %v576 = vld [vmem:[%s523 + $0x30] sm:$0xe]
        %v577 = vld [vmem:[%s523 + $0x3c] sm:$0xe]
        %v578 = vld [vmem:[%s523 + $0x48] sm:$0xe]
        %v579 = vld [vmem:[%s523 + $0x54] sm:$0xe]
        %v580 = vld [vmem:[%s523 + $0x60] sm:$0xe]
        %v581 = vld [vmem:[%s523 + $0x6c] sm:$0xe]
        %v582 = vld [vmem:[%s523 + $0x78] sm:$0xe]
        %v583 = vld [vmem:[%s523 + $0x84] sm:$0xe]
        %v584 = vld [vmem:[%s523 + $0x90] sm:$0xe]
        %v585 = vld [vmem:[%s523 + $0x9c] sm:$0xe]
        %v586 = vld [vmem:[%s523 + $0xa8] sm:$0xe]
        %v587 = vld [vmem:[%s523 + $0xb4] sm:$0xe]
        %v620 = vunpack.c.l.b16 %v388
        %v621 = vunpack.c.l.b16 %v389
        %v622 = vunpack.c.l.b16 %v390
        %v623 = vunpack.c.l.b16 %v391
        %v624 = vunpack.c.l.b16 %v392
        %v625 = vunpack.c.l.b16 %v393
        %v626 = vunpack.c.l.b16 %v394
        %v627 = vunpack.c.l.b16 %v395
        %v628 = vunpack.c.l.b16 %v396
        %v629 = vunpack.c.l.b16 %v397
        %v630 = vunpack.c.l.b16 %v398
        %v631 = vunpack.c.l.b16 %v399
        %v632 = vunpack.c.l.b16 %v400
        %v633 = vunpack.c.l.b16 %v401
        %v634 = vunpack.c.l.b16 %v402
        %v635 = vunpack.c.l.b16 %v403
        %v636 = vunpack.c.l.b16 %v404
        %v637 = vunpack.c.l.b16 %v405
        %v638 = vunpack.c.l.b16 %v406
        %v639 = vunpack.c.l.b16 %v407
        %v640 = vunpack.c.l.b16 %v408
        %v641 = vunpack.c.l.b16 %v409
        %v642 = vunpack.c.l.b16 %v410
        %v643 = vunpack.c.l.b16 %v411
        %v644 = vunpack.c.l.b16 %v412
        %v645 = vunpack.c.l.b16 %v413
        %v646 = vunpack.c.l.b16 %v414
        %v647 = vunpack.c.l.b16 %v415
        %v648 = vunpack.c.l.b16 %v416
        %v649 = vunpack.c.l.b16 %v417
        %v650 = vunpack.c.l.b16 %v418
        %v651 = vunpack.c.l.b16 %v419
        %v652 = vpack.c.b16 %v621, %v620
        %v653 = vpack.c.b16 %v623, %v622
        %v654 = vpack.c.b16 %v625, %v624
        %v655 = vpack.c.b16 %v627, %v626
        %v656 = vpack.c.b16 %v629, %v628
        %v657 = vpack.c.b16 %v631, %v630
        %v658 = vpack.c.b16 %v633, %v632
        %v659 = vpack.c.b16 %v635, %v634
        %v660 = vpack.c.b16 %v637, %v636
        %v661 = vpack.c.b16 %v639, %v638
        %v662 = vpack.c.b16 %v641, %v640
        %v663 = vpack.c.b16 %v643, %v642
        %v664 = vpack.c.b16 %v645, %v644
        %v665 = vpack.c.b16 %v647, %v646
        %v666 = vpack.c.b16 %v649, %v648
        %v667 = vpack.c.b16 %v651, %v650
        %v684 = vunpack.c.l.b16 %v420
        %v685 = vunpack.c.l.b16 %v421
        %v686 = vunpack.c.l.b16 %v422
        %v687 = vunpack.c.l.b16 %v423
        %v688 = vunpack.c.l.b16 %v424
        %v689 = vunpack.c.l.b16 %v425
        %v690 = vunpack.c.l.b16 %v426
        %v691 = vunpack.c.l.b16 %v427
        %v692 = vunpack.c.l.b16 %v428
        %v693 = vunpack.c.l.b16 %v429
        %v694 = vunpack.c.l.b16 %v430
        %v695 = vunpack.c.l.b16 %v431
        %v696 = vunpack.c.l.b16 %v432
        %v697 = vunpack.c.l.b16 %v433
        %v698 = vunpack.c.l.b16 %v434
        %v699 = vunpack.c.l.b16 %v435
        %v700 = vpack.c.b16 %v684, %v684
        %v701 = vpack.c.b16 %v685, %v685
        %v702 = vpack.c.b16 %v686, %v686
        %v703 = vpack.c.b16 %v687, %v687
        %v704 = vpack.c.b16 %v688, %v688
        %v705 = vpack.c.b16 %v689, %v689
        %v706 = vpack.c.b16 %v690, %v690
        %v707 = vpack.c.b16 %v691, %v691
        %v708 = vpack.c.b16 %v692, %v692
        %v709 = vpack.c.b16 %v693, %v693
        %v710 = vpack.c.b16 %v694, %v694
        %v711 = vpack.c.b16 %v695, %v695
        %v712 = vpack.c.b16 %v696, %v696
        %v713 = vpack.c.b16 %v697, %v697
        %v714 = vpack.c.b16 %v698, %v698
        %v715 = vpack.c.b16 %v699, %v699
        %vm716 = vsmask.f32 7424
        %v718 = vshrl.u32 %v652, 16
        %v720 = vshll.u32 %v652, 16
        %v722 = vrot.slane %v720, 1
        %v723 = vor.u32 %v718, %v722
        %v725 = vshll.u32 %v700, 16
        %v727 = vrot.slane %v725, 1
        %v728 = vsel %vm716, %v723, %v727
        %v730 = vshrl.u32 %v653, 16
        %v732 = vshll.u32 %v653, 16
        %v734 = vrot.slane %v732, 1
        %v735 = vor.u32 %v730, %v734
        %v737 = vshll.u32 %v701, 16
        %v739 = vrot.slane %v737, 1
        %v740 = vsel %vm716, %v735, %v739
        %v742 = vshrl.u32 %v654, 16
        %v744 = vshll.u32 %v654, 16
        %v746 = vrot.slane %v744, 1
        %v747 = vor.u32 %v742, %v746
        %v749 = vshll.u32 %v702, 16
        %v751 = vrot.slane %v749, 1
        %v752 = vsel %vm716, %v747, %v751
        %v754 = vshrl.u32 %v655, 16
        %v756 = vshll.u32 %v655, 16
        %v758 = vrot.slane %v756, 1
        %v759 = vor.u32 %v754, %v758
        %v761 = vshll.u32 %v703, 16
        %v763 = vrot.slane %v761, 1
        %v764 = vsel %vm716, %v759, %v763
        %v766 = vshrl.u32 %v656, 16
        %v768 = vshll.u32 %v656, 16
        %v770 = vrot.slane %v768, 1
        %v771 = vor.u32 %v766, %v770
        %v773 = vshll.u32 %v704, 16
        %v775 = vrot.slane %v773, 1
        %v776 = vsel %vm716, %v771, %v775
        %v778 = vshrl.u32 %v657, 16
        %v780 = vshll.u32 %v657, 16
        %v782 = vrot.slane %v780, 1
        %v783 = vor.u32 %v778, %v782
        %v785 = vshll.u32 %v705, 16
        %v787 = vrot.slane %v785, 1
        %v788 = vsel %vm716, %v783, %v787
        %v790 = vshrl.u32 %v658, 16
        %v792 = vshll.u32 %v658, 16
        %v794 = vrot.slane %v792, 1
        %v795 = vor.u32 %v790, %v794
        %v797 = vshll.u32 %v706, 16
        %v799 = vrot.slane %v797, 1
        %v800 = vsel %vm716, %v795, %v799
        %v802 = vshrl.u32 %v659, 16
        %v804 = vshll.u32 %v659, 16
        %v806 = vrot.slane %v804, 1
        %v807 = vor.u32 %v802, %v806
        %v809 = vshll.u32 %v707, 16
        %v811 = vrot.slane %v809, 1
        %v812 = vsel %vm716, %v807, %v811
        %v814 = vshrl.u32 %v660, 16
        %v816 = vshll.u32 %v660, 16
        %v818 = vrot.slane %v816, 1
        %v819 = vor.u32 %v814, %v818
        %v821 = vshll.u32 %v708, 16
        %v823 = vrot.slane %v821, 1
        %v824 = vsel %vm716, %v819, %v823
        %v826 = vshrl.u32 %v661, 16
        %v828 = vshll.u32 %v661, 16
        %v830 = vrot.slane %v828, 1
        %v831 = vor.u32 %v826, %v830
        %v833 = vshll.u32 %v709, 16
        %v835 = vrot.slane %v833, 1
        %v836 = vsel %vm716, %v831, %v835
        %v838 = vshrl.u32 %v662, 16
        %v840 = vshll.u32 %v662, 16
        %v842 = vrot.slane %v840, 1
        %v843 = vor.u32 %v838, %v842
        %v845 = vshll.u32 %v710, 16
        %v847 = vrot.slane %v845, 1
        %v848 = vsel %vm716, %v843, %v847
        %v850 = vshrl.u32 %v663, 16
        %v852 = vshll.u32 %v663, 16
        %v854 = vrot.slane %v852, 1
        %v855 = vor.u32 %v850, %v854
        %v857 = vshll.u32 %v711, 16
        %v859 = vrot.slane %v857, 1
        %v860 = vsel %vm716, %v855, %v859
        %v862 = vshrl.u32 %v664, 16
        %v864 = vshll.u32 %v664, 16
        %v866 = vrot.slane %v864, 1
        %v867 = vor.u32 %v862, %v866
        %v869 = vshll.u32 %v712, 16
        %v871 = vrot.slane %v869, 1
        %v872 = vsel %vm716, %v867, %v871
        %v874 = vshrl.u32 %v665, 16
        %v876 = vshll.u32 %v665, 16
        %v878 = vrot.slane %v876, 1
        %v879 = vor.u32 %v874, %v878
        %v881 = vshll.u32 %v713, 16
        %v883 = vrot.slane %v881, 1
        %v884 = vsel %vm716, %v879, %v883
        %v886 = vshrl.u32 %v666, 16
        %v888 = vshll.u32 %v666, 16
        %v890 = vrot.slane %v888, 1
        %v891 = vor.u32 %v886, %v890
        %v893 = vshll.u32 %v714, 16
        %v895 = vrot.slane %v893, 1
        %v896 = vsel %vm716, %v891, %v895
        %v898 = vshrl.u32 %v667, 16
        %v900 = vshll.u32 %v667, 16
        %v902 = vrot.slane %v900, 1
        %v903 = vor.u32 %v898, %v902
        %v905 = vshll.u32 %v715, 16
        %v907 = vrot.slane %v905, 1
        %v908 = vsel %vm716, %v903, %v907
        %909 = vrot.lane.b32.xlu0 %v728, 4
        %v910 = vpop.permute.xlu0 %909
        %911 = vrot.lane.b32.xlu0 %v740, 4
        %v912 = vpop.permute.xlu0 %911
        %913 = vrot.lane.b32.xlu0 %v752, 4
        %v914 = vpop.permute.xlu0 %913
        %915 = vrot.lane.b32.xlu0 %v764, 4
        %v916 = vpop.permute.xlu0 %915
        %917 = vrot.lane.b32.xlu0 %v776, 4
        %v918 = vpop.permute.xlu0 %917
        %919 = vrot.lane.b32.xlu0 %v788, 4
        %v920 = vpop.permute.xlu0 %919
        %921 = vrot.lane.b32.xlu0 %v800, 4
        %v922 = vpop.permute.xlu0 %921
        %923 = vrot.lane.b32.xlu0 %v812, 4
        %v924 = vpop.permute.xlu0 %923
        %925 = vrot.lane.b32.xlu0 %v824, 4
        %v926 = vpop.permute.xlu0 %925
        %927 = vrot.lane.b32.xlu0 %v836, 4
        %v928 = vpop.permute.xlu0 %927
        %929 = vrot.lane.b32.xlu0 %v848, 4
        %v930 = vpop.permute.xlu0 %929
        %931 = vrot.lane.b32.xlu0 %v860, 4
        %v932 = vpop.permute.xlu0 %931
        %933 = vrot.lane.b32.xlu0 %v872, 4
        %v934 = vpop.permute.xlu0 %933
        %935 = vrot.lane.b32.xlu0 %v884, 4
        %v936 = vpop.permute.xlu0 %935
        %937 = vrot.lane.b32.xlu0 %v896, 4
        %v938 = vpop.permute.xlu0 %937
        %939 = vrot.lane.b32.xlu0 %v908, 4
        %v940 = vpop.permute.xlu0 %939
        %v957 = vunpack.c.l.b16 %v436
        %v958 = vunpack.c.l.b16 %v437
        %v959 = vunpack.c.l.b16 %v438
        %v960 = vunpack.c.l.b16 %v439
        %v961 = vunpack.c.l.b16 %v440
        %v962 = vunpack.c.l.b16 %v441
        %v963 = vunpack.c.l.b16 %v442
        %v964 = vunpack.c.l.b16 %v443
        %v965 = vunpack.c.l.b16 %v444
        %v966 = vunpack.c.l.b16 %v445
        %v967 = vunpack.c.l.b16 %v446
        %v968 = vunpack.c.l.b16 %v447
        %v969 = vunpack.c.l.b16 %v448
        %v970 = vunpack.c.l.b16 %v449
        %v971 = vunpack.c.l.b16 %v450
        %v972 = vunpack.c.l.b16 %v451
        %v973 = vpack.c.b16 %v621, %v957
        %v974 = vpack.c.b16 %v623, %v958
        %v975 = vpack.c.b16 %v625, %v959
        %v976 = vpack.c.b16 %v627, %v960
        %v977 = vpack.c.b16 %v629, %v961
        %v978 = vpack.c.b16 %v631, %v962
        %v979 = vpack.c.b16 %v633, %v963
        %v980 = vpack.c.b16 %v635, %v964
        %v981 = vpack.c.b16 %v637, %v965
        %v982 = vpack.c.b16 %v639, %v966
        %v983 = vpack.c.b16 %v641, %v967
        %v984 = vpack.c.b16 %v643, %v968
        %v985 = vpack.c.b16 %v645, %v969
        %v986 = vpack.c.b16 %v647, %v970
        %v987 = vpack.c.b16 %v649, %v971
        %v988 = vpack.c.b16 %v651, %v972
        %vm989 = vcmask 1046528
        %v990 = vrot.slane %v973, 1
        %v991 = vrot.slane %v700, 1
        %v992 = vsel %vm989, %v990, %v991
        %v993 = vrot.slane %v974, 1
        %v994 = vrot.slane %v701, 1
        %v995 = vsel %vm989, %v993, %v994
        %v996 = vrot.slane %v975, 1
        %v997 = vrot.slane %v702, 1
        %v998 = vsel %vm989, %v996, %v997
        %v999 = vrot.slane %v976, 1
        %v1000 = vrot.slane %v703, 1
        %v1001 = vsel %vm989, %v999, %v1000
        %v1002 = vrot.slane %v977, 1
        %v1003 = vrot.slane %v704, 1
        %v1004 = vsel %vm989, %v1002, %v1003
        %v1005 = vrot.slane %v978, 1
        %v1006 = vrot.slane %v705, 1
        %v1007 = vsel %vm989, %v1005, %v1006
        %v1008 = vrot.slane %v979, 1
        %v1009 = vrot.slane %v706, 1
        %v1010 = vsel %vm989, %v1008, %v1009
        %v1011 = vrot.slane %v980, 1
        %v1012 = vrot.slane %v707, 1
        %v1013 = vsel %vm989, %v1011, %v1012
        %v1014 = vrot.slane %v981, 1
        %v1015 = vrot.slane %v708, 1
        %v1016 = vsel %vm989, %v1014, %v1015
        %v1017 = vrot.slane %v982, 1
        %v1018 = vrot.slane %v709, 1
        %v1019 = vsel %vm989, %v1017, %v1018
        %v1020 = vrot.slane %v983, 1
        %v1021 = vrot.slane %v710, 1
        %v1022 = vsel %vm989, %v1020, %v1021
        %v1023 = vrot.slane %v984, 1
        %v1024 = vrot.slane %v711, 1
        %v1025 = vsel %vm989, %v1023, %v1024
        %v1026 = vrot.slane %v985, 1
        %v1027 = vrot.slane %v712, 1
        %v1028 = vsel %vm989, %v1026, %v1027
        %v1029 = vrot.slane %v986, 1
        %v1030 = vrot.slane %v713, 1
        %v1031 = vsel %vm989, %v1029, %v1030
        %v1032 = vrot.slane %v987, 1
        %v1033 = vrot.slane %v714, 1
        %v1034 = vsel %vm989, %v1032, %v1033
        %v1035 = vrot.slane %v988, 1
        %v1036 = vrot.slane %v715, 1
        %v1037 = vsel %vm989, %v1035, %v1036
        %1038 = vrot.lane.b32.xlu0 %v992, 8
        %v1039 = vpop.permute.xlu0 %1038
        %1040 = vrot.lane.b32.xlu0 %v995, 8
        %v1041 = vpop.permute.xlu0 %1040
        %1042 = vrot.lane.b32.xlu0 %v998, 8
        %v1043 = vpop.permute.xlu0 %1042
        %1044 = vrot.lane.b32.xlu0 %v1001, 8
        %v1045 = vpop.permute.xlu0 %1044
        %1046 = vrot.lane.b32.xlu0 %v1004, 8
        %v1047 = vpop.permute.xlu0 %1046
        %1048 = vrot.lane.b32.xlu0 %v1007, 8
        %v1049 = vpop.permute.xlu0 %1048
        %1050 = vrot.lane.b32.xlu0 %v1010, 8
        %v1051 = vpop.permute.xlu0 %1050
        %1052 = vrot.lane.b32.xlu0 %v1013, 8
        %v1053 = vpop.permute.xlu0 %1052
        %1054 = vrot.lane.b32.xlu0 %v1016, 8
        %v1055 = vpop.permute.xlu0 %1054
        %1056 = vrot.lane.b32.xlu0 %v1019, 8
        %v1057 = vpop.permute.xlu0 %1056
        %1058 = vrot.lane.b32.xlu0 %v1022, 8
        %v1059 = vpop.permute.xlu0 %1058
        %1060 = vrot.lane.b32.xlu0 %v1025, 8
        %v1061 = vpop.permute.xlu0 %1060
        %1062 = vrot.lane.b32.xlu0 %v1028, 8
        %v1063 = vpop.permute.xlu0 %1062
        %1064 = vrot.lane.b32.xlu0 %v1031, 8
        %v1065 = vpop.permute.xlu0 %1064
        %1066 = vrot.lane.b32.xlu0 %v1034, 8
        %v1067 = vpop.permute.xlu0 %1066
        %1068 = vrot.lane.b32.xlu0 %v1037, 8
        %v1069 = vpop.permute.xlu0 %1068
        %v1102 = vunpack.c.l.b16 %v456
        %v1103 = vunpack.c.l.b16 %v457
        %v1104 = vunpack.c.l.b16 %v458
        %v1105 = vunpack.c.l.b16 %v459
        %v1106 = vunpack.c.l.b16 %v460
        %v1107 = vunpack.c.l.b16 %v461
        %v1108 = vunpack.c.l.b16 %v462
        %v1109 = vunpack.c.l.b16 %v463
        %v1110 = vunpack.c.l.b16 %v464
        %v1111 = vunpack.c.l.b16 %v465
        %v1112 = vunpack.c.l.b16 %v466
        %v1113 = vunpack.c.l.b16 %v467
        %v1114 = vunpack.c.l.b16 %v468
        %v1115 = vunpack.c.l.b16 %v469
        %v1116 = vunpack.c.l.b16 %v470
        %v1117 = vunpack.c.l.b16 %v471
        %v1118 = vunpack.c.l.b16 %v472
        %v1119 = vunpack.c.l.b16 %v473
        %v1120 = vunpack.c.l.b16 %v474
        %v1121 = vunpack.c.l.b16 %v475
        %v1122 = vunpack.c.l.b16 %v476
        %v1123 = vunpack.c.l.b16 %v477
        %v1124 = vunpack.c.l.b16 %v478
        %v1125 = vunpack.c.l.b16 %v479
        %v1126 = vunpack.c.l.b16 %v480
        %v1127 = vunpack.c.l.b16 %v481
        %v1128 = vunpack.c.l.b16 %v482
        %v1129 = vunpack.c.l.b16 %v483
        %v1130 = vunpack.c.l.b16 %v484
        %v1131 = vunpack.c.l.b16 %v485
        %v1132 = vunpack.c.l.b16 %v486
        %v1133 = vunpack.c.l.b16 %v487
        %v1134 = vpack.c.b16 %v1103, %v1102
        %v1135 = vpack.c.b16 %v1105, %v1104
        %v1136 = vpack.c.b16 %v1107, %v1106
        %v1137 = vpack.c.b16 %v1109, %v1108
        %v1138 = vpack.c.b16 %v1111, %v1110
        %v1139 = vpack.c.b16 %v1113, %v1112
        %v1140 = vpack.c.b16 %v1115, %v1114
        %v1141 = vpack.c.b16 %v1117, %v1116
        %v1142 = vpack.c.b16 %v1119, %v1118
        %v1143 = vpack.c.b16 %v1121, %v1120
        %v1144 = vpack.c.b16 %v1123, %v1122
        %v1145 = vpack.c.b16 %v1125, %v1124
        %v1146 = vpack.c.b16 %v1127, %v1126
        %v1147 = vpack.c.b16 %v1129, %v1128
        %v1148 = vpack.c.b16 %v1131, %v1130
        %v1149 = vpack.c.b16 %v1133, %v1132
        %1150 = vrot.lane.b32.xlu0 %v1134, 12
        %v1151 = vpop.permute.xlu0 %1150
        %1152 = vrot.lane.b32.xlu0 %v1135, 12
        %v1153 = vpop.permute.xlu0 %1152
        %1154 = vrot.lane.b32.xlu0 %v1136, 12
        %v1155 = vpop.permute.xlu0 %1154
        %1156 = vrot.lane.b32.xlu0 %v1137, 12
        %v1157 = vpop.permute.xlu0 %1156
        %1158 = vrot.lane.b32.xlu0 %v1138, 12
        %v1159 = vpop.permute.xlu0 %1158
        %1160 = vrot.lane.b32.xlu0 %v1139, 12
        %v1161 = vpop.permute.xlu0 %1160
        %1162 = vrot.lane.b32.xlu0 %v1140, 12
        %v1163 = vpop.permute.xlu0 %1162
        %1164 = vrot.lane.b32.xlu0 %v1141, 12
        %v1165 = vpop.permute.xlu0 %1164
        %1166 = vrot.lane.b32.xlu0 %v1142, 12
        %v1167 = vpop.permute.xlu0 %1166
        %1168 = vrot.lane.b32.xlu0 %v1143, 12
        %v1169 = vpop.permute.xlu0 %1168
        %1170 = vrot.lane.b32.xlu0 %v1144, 12
        %v1171 = vpop.permute.xlu0 %1170
        %1172 = vrot.lane.b32.xlu0 %v1145, 12
        %v1173 = vpop.permute.xlu0 %1172
        %1174 = vrot.lane.b32.xlu0 %v1146, 12
        %v1175 = vpop.permute.xlu0 %1174
        %1176 = vrot.lane.b32.xlu0 %v1147, 12
        %v1177 = vpop.permute.xlu0 %1176
        %1178 = vrot.lane.b32.xlu0 %v1148, 12
        %v1179 = vpop.permute.xlu0 %1178
        %1180 = vrot.lane.b32.xlu0 %v1149, 12
        %v1181 = vpop.permute.xlu0 %1180
        %v1198 = vunpack.c.l.b16 %v488
        %v1199 = vunpack.c.l.b16 %v489
        %v1200 = vunpack.c.l.b16 %v490
        %v1201 = vunpack.c.l.b16 %v491
        %v1202 = vunpack.c.l.b16 %v492
        %v1203 = vunpack.c.l.b16 %v493
        %v1204 = vunpack.c.l.b16 %v494
        %v1205 = vunpack.c.l.b16 %v495
        %v1206 = vunpack.c.l.b16 %v496
        %v1207 = vunpack.c.l.b16 %v497
        %v1208 = vunpack.c.l.b16 %v498
        %v1209 = vunpack.c.l.b16 %v499
        %v1210 = vunpack.c.l.b16 %v500
        %v1211 = vunpack.c.l.b16 %v501
        %v1212 = vunpack.c.l.b16 %v502
        %v1213 = vunpack.c.l.b16 %v503
        %v1214 = vpack.c.b16 %v1198, %v1198
        %v1215 = vpack.c.b16 %v1199, %v1199
        %v1216 = vpack.c.b16 %v1200, %v1200
        %v1217 = vpack.c.b16 %v1201, %v1201
        %v1218 = vpack.c.b16 %v1202, %v1202
        %v1219 = vpack.c.b16 %v1203, %v1203
        %v1220 = vpack.c.b16 %v1204, %v1204
        %v1221 = vpack.c.b16 %v1205, %v1205
        %v1222 = vpack.c.b16 %v1206, %v1206
        %v1223 = vpack.c.b16 %v1207, %v1207
        %v1224 = vpack.c.b16 %v1208, %v1208
        %v1225 = vpack.c.b16 %v1209, %v1209
        %v1226 = vpack.c.b16 %v1210, %v1210
        %v1227 = vpack.c.b16 %v1211, %v1211
        %v1228 = vpack.c.b16 %v1212, %v1212
        %v1229 = vpack.c.b16 %v1213, %v1213
        %v1231 = vshrl.u32 %v1134, 16
        %v1233 = vshll.u32 %v1134, 16
        %v1235 = vrot.slane %v1233, 1
        %v1236 = vor.u32 %v1231, %v1235
        %v1238 = vshll.u32 %v1214, 16
        %v1240 = vrot.slane %v1238, 1
        %v1241 = vsel %vm716, %v1236, %v1240
        %v1243 = vshrl.u32 %v1135, 16
        %v1245 = vshll.u32 %v1135, 16
        %v1247 = vrot.slane %v1245, 1
        %v1248 = vor.u32 %v1243, %v1247
        %v1250 = vshll.u32 %v1215, 16
        %v1252 = vrot.slane %v1250, 1
        %v1253 = vsel %vm716, %v1248, %v1252
        %v1255 = vshrl.u32 %v1136, 16
        %v1257 = vshll.u32 %v1136, 16
        %v1259 = vrot.slane %v1257, 1
        %v1260 = vor.u32 %v1255, %v1259
        %v1262 = vshll.u32 %v1216, 16
        %v1264 = vrot.slane %v1262, 1
        %v1265 = vsel %vm716, %v1260, %v1264
        %v1267 = vshrl.u32 %v1137, 16
        %v1269 = vshll.u32 %v1137, 16
        %v1271 = vrot.slane %v1269, 1
        %v1272 = vor.u32 %v1267, %v1271
        %v1274 = vshll.u32 %v1217, 16
        %v1276 = vrot.slane %v1274, 1
        %v1277 = vsel %vm716, %v1272, %v1276
        %v1279 = vshrl.u32 %v1138, 16
        %v1281 = vshll.u32 %v1138, 16
        %v1283 = vrot.slane %v1281, 1
        %v1284 = vor.u32 %v1279, %v1283
        %v1286 = vshll.u32 %v1218, 16
        %v1288 = vrot.slane %v1286, 1
        %v1289 = vsel %vm716, %v1284, %v1288
        %v1291 = vshrl.u32 %v1139, 16
        %v1293 = vshll.u32 %v1139, 16
        %v1295 = vrot.slane %v1293, 1
        %v1296 = vor.u32 %v1291, %v1295
        %v1298 = vshll.u32 %v1219, 16
        %v1300 = vrot.slane %v1298, 1
        %v1301 = vsel %vm716, %v1296, %v1300
        %v1303 = vshrl.u32 %v1140, 16
        %v1305 = vshll.u32 %v1140, 16
        %v1307 = vrot.slane %v1305, 1
        %v1308 = vor.u32 %v1303, %v1307
        %v1310 = vshll.u32 %v1220, 16
        %v1312 = vrot.slane %v1310, 1
        %v1313 = vsel %vm716, %v1308, %v1312
        %v1315 = vshrl.u32 %v1141, 16
        %v1317 = vshll.u32 %v1141, 16
        %v1319 = vrot.slane %v1317, 1
        %v1320 = vor.u32 %v1315, %v1319
        %v1322 = vshll.u32 %v1221, 16
        %v1324 = vrot.slane %v1322, 1
        %v1325 = vsel %vm716, %v1320, %v1324
        %v1327 = vshrl.u32 %v1142, 16
        %v1329 = vshll.u32 %v1142, 16
        %v1331 = vrot.slane %v1329, 1
        %v1332 = vor.u32 %v1327, %v1331
        %v1334 = vshll.u32 %v1222, 16
        %v1336 = vrot.slane %v1334, 1
        %v1337 = vsel %vm716, %v1332, %v1336
        %v1339 = vshrl.u32 %v1143, 16
        %v1341 = vshll.u32 %v1143, 16
        %v1343 = vrot.slane %v1341, 1
        %v1344 = vor.u32 %v1339, %v1343
        %v1346 = vshll.u32 %v1223, 16
        %v1348 = vrot.slane %v1346, 1
        %v1349 = vsel %vm716, %v1344, %v1348
        %v1351 = vshrl.u32 %v1144, 16
        %v1353 = vshll.u32 %v1144, 16
        %v1355 = vrot.slane %v1353, 1
        %v1356 = vor.u32 %v1351, %v1355
        %v1358 = vshll.u32 %v1224, 16
        %v1360 = vrot.slane %v1358, 1
        %v1361 = vsel %vm716, %v1356, %v1360
        %v1363 = vshrl.u32 %v1145, 16
        %v1365 = vshll.u32 %v1145, 16
        %v1367 = vrot.slane %v1365, 1
        %v1368 = vor.u32 %v1363, %v1367
        %v1370 = vshll.u32 %v1225, 16
        %v1372 = vrot.slane %v1370, 1
        %v1373 = vsel %vm716, %v1368, %v1372
        %v1375 = vshrl.u32 %v1146, 16
        %v1377 = vshll.u32 %v1146, 16
        %v1379 = vrot.slane %v1377, 1
        %v1380 = vor.u32 %v1375, %v1379
        %v1382 = vshll.u32 %v1226, 16
        %v1384 = vrot.slane %v1382, 1
        %v1385 = vsel %vm716, %v1380, %v1384
        %v1387 = vshrl.u32 %v1147, 16
        %v1389 = vshll.u32 %v1147, 16
        %v1391 = vrot.slane %v1389, 1
        %v1392 = vor.u32 %v1387, %v1391
        %v1394 = vshll.u32 %v1227, 16
        %v1396 = vrot.slane %v1394, 1
        %v1397 = vsel %vm716, %v1392, %v1396
        %v1399 = vshrl.u32 %v1148, 16
        %v1401 = vshll.u32 %v1148, 16
        %v1403 = vrot.slane %v1401, 1
        %v1404 = vor.u32 %v1399, %v1403
        %v1406 = vshll.u32 %v1228, 16
        %v1408 = vrot.slane %v1406, 1
        %v1409 = vsel %vm716, %v1404, %v1408
        %v1411 = vshrl.u32 %v1149, 16
        %v1413 = vshll.u32 %v1149, 16
        %v1415 = vrot.slane %v1413, 1
        %v1416 = vor.u32 %v1411, %v1415
        %v1418 = vshll.u32 %v1229, 16
        %v1420 = vrot.slane %v1418, 1
        %v1421 = vsel %vm716, %v1416, %v1420
        %1422 = vrot.lane.b32.xlu0 %v1241, 16
        %v1423 = vpop.permute.xlu0 %1422
        %1424 = vrot.lane.b32.xlu0 %v1253, 16
        %v1425 = vpop.permute.xlu0 %1424
        %1426 = vrot.lane.b32.xlu0 %v1265, 16
        %v1427 = vpop.permute.xlu0 %1426
        %1428 = vrot.lane.b32.xlu0 %v1277, 16
        %v1429 = vpop.permute.xlu0 %1428
        %1430 = vrot.lane.b32.xlu0 %v1289, 16
        %v1431 = vpop.permute.xlu0 %1430
        %1432 = vrot.lane.b32.xlu0 %v1301, 16
        %v1433 = vpop.permute.xlu0 %1432
        %1434 = vrot.lane.b32.xlu0 %v1313, 16
        %v1435 = vpop.permute.xlu0 %1434
        %1436 = vrot.lane.b32.xlu0 %v1325, 16
        %v1437 = vpop.permute.xlu0 %1436
        %1438 = vrot.lane.b32.xlu0 %v1337, 16
        %v1439 = vpop.permute.xlu0 %1438
        %1440 = vrot.lane.b32.xlu0 %v1349, 16
        %v1441 = vpop.permute.xlu0 %1440
        %1442 = vrot.lane.b32.xlu0 %v1361, 16
        %v1443 = vpop.permute.xlu0 %1442
        %1444 = vrot.lane.b32.xlu0 %v1373, 16
        %v1445 = vpop.permute.xlu0 %1444
        %1446 = vrot.lane.b32.xlu0 %v1385, 16
        %v1447 = vpop.permute.xlu0 %1446
        %1448 = vrot.lane.b32.xlu0 %v1397, 16
        %v1449 = vpop.permute.xlu0 %1448
        %1450 = vrot.lane.b32.xlu0 %v1409, 16
        %v1451 = vpop.permute.xlu0 %1450
        %1452 = vrot.lane.b32.xlu0 %v1421, 16
        %v1453 = vpop.permute.xlu0 %1452
        %v1470 = vunpack.c.l.b16 %v504
        %v1471 = vunpack.c.l.b16 %v505
        %v1472 = vunpack.c.l.b16 %v506
        %v1473 = vunpack.c.l.b16 %v507
        %v1474 = vunpack.c.l.b16 %v508
        %v1475 = vunpack.c.l.b16 %v509
        %v1476 = vunpack.c.l.b16 %v510
        %v1477 = vunpack.c.l.b16 %v511
        %v1478 = vunpack.c.l.b16 %v512
        %v1479 = vunpack.c.l.b16 %v513
        %v1480 = vunpack.c.l.b16 %v514
        %v1481 = vunpack.c.l.b16 %v515
        %v1482 = vunpack.c.l.b16 %v516
        %v1483 = vunpack.c.l.b16 %v517
        %v1484 = vunpack.c.l.b16 %v518
        %v1485 = vunpack.c.l.b16 %v519
        %v1486 = vpack.c.b16 %v1103, %v1470
        %v1487 = vpack.c.b16 %v1105, %v1471
        %v1488 = vpack.c.b16 %v1107, %v1472
        %v1489 = vpack.c.b16 %v1109, %v1473
        %v1490 = vpack.c.b16 %v1111, %v1474
        %v1491 = vpack.c.b16 %v1113, %v1475
        %v1492 = vpack.c.b16 %v1115, %v1476
        %v1493 = vpack.c.b16 %v1117, %v1477
        %v1494 = vpack.c.b16 %v1119, %v1478
        %v1495 = vpack.c.b16 %v1121, %v1479
        %v1496 = vpack.c.b16 %v1123, %v1480
        %v1497 = vpack.c.b16 %v1125, %v1481
        %v1498 = vpack.c.b16 %v1127, %v1482
        %v1499 = vpack.c.b16 %v1129, %v1483
        %v1500 = vpack.c.b16 %v1131, %v1484
        %v1501 = vpack.c.b16 %v1133, %v1485
        %v1502 = vrot.slane %v1486, 1
        %v1503 = vrot.slane %v1214, 1
        %v1504 = vsel %vm989, %v1502, %v1503
        %v1505 = vrot.slane %v1487, 1
        %v1506 = vrot.slane %v1215, 1
        %v1507 = vsel %vm989, %v1505, %v1506
        %v1508 = vrot.slane %v1488, 1
        %v1509 = vrot.slane %v1216, 1
        %v1510 = vsel %vm989, %v1508, %v1509
        %v1511 = vrot.slane %v1489, 1
        %v1512 = vrot.slane %v1217, 1
        %v1513 = vsel %vm989, %v1511, %v1512
        %v1514 = vrot.slane %v1490, 1
        %v1515 = vrot.slane %v1218, 1
        %v1516 = vsel %vm989, %v1514, %v1515
        %v1517 = vrot.slane %v1491, 1
        %v1518 = vrot.slane %v1219, 1
        %v1519 = vsel %vm989, %v1517, %v1518
        %v1520 = vrot.slane %v1492, 1
        %v1521 = vrot.slane %v1220, 1
        %v1522 = vsel %vm989, %v1520, %v1521
        %v1523 = vrot.slane %v1493, 1
        %v1524 = vrot.slane %v1221, 1
        %v1525 = vsel %vm989, %v1523, %v1524
        %v1526 = vrot.slane %v1494, 1
        %v1527 = vrot.slane %v1222, 1
        %v1528 = vsel %vm989, %v1526, %v1527
        %v1529 = vrot.slane %v1495, 1
        %v1530 = vrot.slane %v1223, 1
        %v1531 = vsel %vm989, %v1529, %v1530
        %v1532 = vrot.slane %v1496, 1
        %v1533 = vrot.slane %v1224, 1
        %v1534 = vsel %vm989, %v1532, %v1533
        %v1535 = vrot.slane %v1497, 1
        %v1536 = vrot.slane %v1225, 1
        %v1537 = vsel %vm989, %v1535, %v1536
        %v1538 = vrot.slane %v1498, 1
        %v1539 = vrot.slane %v1226, 1
        %v1540 = vsel %vm989, %v1538, %v1539
        %v1541 = vrot.slane %v1499, 1
        %v1542 = vrot.slane %v1227, 1
        %v1543 = vsel %vm989, %v1541, %v1542
        %v1544 = vrot.slane %v1500, 1
        %v1545 = vrot.slane %v1228, 1
        %v1546 = vsel %vm989, %v1544, %v1545
        %v1547 = vrot.slane %v1501, 1
        %v1548 = vrot.slane %v1229, 1
        %v1549 = vsel %vm989, %v1547, %v1548
        %1550 = vrot.lane.b32.xlu0 %v1504, 20
        %v1551 = vpop.permute.xlu0 %1550
        %1552 = vrot.lane.b32.xlu0 %v1507, 20
        %v1553 = vpop.permute.xlu0 %1552
        %1554 = vrot.lane.b32.xlu0 %v1510, 20
        %v1555 = vpop.permute.xlu0 %1554
        %1556 = vrot.lane.b32.xlu0 %v1513, 20
        %v1557 = vpop.permute.xlu0 %1556
        %1558 = vrot.lane.b32.xlu0 %v1516, 20
        %v1559 = vpop.permute.xlu0 %1558
        %1560 = vrot.lane.b32.xlu0 %v1519, 20
        %v1561 = vpop.permute.xlu0 %1560
        %1562 = vrot.lane.b32.xlu0 %v1522, 20
        %v1563 = vpop.permute.xlu0 %1562
        %1564 = vrot.lane.b32.xlu0 %v1525, 20
        %v1565 = vpop.permute.xlu0 %1564
        %1566 = vrot.lane.b32.xlu0 %v1528, 20
        %v1567 = vpop.permute.xlu0 %1566
        %1568 = vrot.lane.b32.xlu0 %v1531, 20
        %v1569 = vpop.permute.xlu0 %1568
        %1570 = vrot.lane.b32.xlu0 %v1534, 20
        %v1571 = vpop.permute.xlu0 %1570
        %1572 = vrot.lane.b32.xlu0 %v1537, 20
        %v1573 = vpop.permute.xlu0 %1572
        %1574 = vrot.lane.b32.xlu0 %v1540, 20
        %v1575 = vpop.permute.xlu0 %1574
        %1576 = vrot.lane.b32.xlu0 %v1543, 20
        %v1577 = vpop.permute.xlu0 %1576
        %1578 = vrot.lane.b32.xlu0 %v1546, 20
        %v1579 = vpop.permute.xlu0 %1578
        %1580 = vrot.lane.b32.xlu0 %v1549, 20
        %v1581 = vpop.permute.xlu0 %1580
        %v1614 = vunpack.c.l.b16 %v524
        %v1615 = vunpack.c.l.b16 %v525
        %v1616 = vunpack.c.l.b16 %v526
        %v1617 = vunpack.c.l.b16 %v527
        %v1618 = vunpack.c.l.b16 %v528
        %v1619 = vunpack.c.l.b16 %v529
        %v1620 = vunpack.c.l.b16 %v530
        %v1621 = vunpack.c.l.b16 %v531
        %v1622 = vunpack.c.l.b16 %v532
        %v1623 = vunpack.c.l.b16 %v533
        %v1624 = vunpack.c.l.b16 %v534
        %v1625 = vunpack.c.l.b16 %v535
        %v1626 = vunpack.c.l.b16 %v536
        %v1627 = vunpack.c.l.b16 %v537
        %v1628 = vunpack.c.l.b16 %v538
        %v1629 = vunpack.c.l.b16 %v539
        %v1630 = vunpack.c.l.b16 %v540
        %v1631 = vunpack.c.l.b16 %v541
        %v1632 = vunpack.c.l.b16 %v542
        %v1633 = vunpack.c.l.b16 %v543
        %v1634 = vunpack.c.l.b16 %v544
        %v1635 = vunpack.c.l.b16 %v545
        %v1636 = vunpack.c.l.b16 %v546
        %v1637 = vunpack.c.l.b16 %v547
        %v1638 = vunpack.c.l.b16 %v548
        %v1639 = vunpack.c.l.b16 %v549
        %v1640 = vunpack.c.l.b16 %v550
        %v1641 = vunpack.c.l.b16 %v551
        %v1642 = vunpack.c.l.b16 %v552
        %v1643 = vunpack.c.l.b16 %v553
        %v1644 = vunpack.c.l.b16 %v554
        %v1645 = vunpack.c.l.b16 %v555
        %v1646 = vpack.c.b16 %v1615, %v1614
        %v1647 = vpack.c.b16 %v1617, %v1616
        %v1648 = vpack.c.b16 %v1619, %v1618
        %v1649 = vpack.c.b16 %v1621, %v1620
        %v1650 = vpack.c.b16 %v1623, %v1622
        %v1651 = vpack.c.b16 %v1625, %v1624
        %v1652 = vpack.c.b16 %v1627, %v1626
        %v1653 = vpack.c.b16 %v1629, %v1628
        %v1654 = vpack.c.b16 %v1631, %v1630
        %v1655 = vpack.c.b16 %v1633, %v1632
        %v1656 = vpack.c.b16 %v1635, %v1634
        %v1657 = vpack.c.b16 %v1637, %v1636
        %v1658 = vpack.c.b16 %v1639, %v1638
        %v1659 = vpack.c.b16 %v1641, %v1640
        %v1660 = vpack.c.b16 %v1643, %v1642
        %v1661 = vpack.c.b16 %v1645, %v1644
        %1662 = vrot.lane.b32.xlu0 %v1646, 24
        %v1663 = vpop.permute.xlu0 %1662
        %1664 = vrot.lane.b32.xlu0 %v1647, 24
        %v1665 = vpop.permute.xlu0 %1664
        %1666 = vrot.lane.b32.xlu0 %v1648, 24
        %v1667 = vpop.permute.xlu0 %1666
        %1668 = vrot.lane.b32.xlu0 %v1649, 24
        %v1669 = vpop.permute.xlu0 %1668
        %1670 = vrot.lane.b32.xlu0 %v1650, 24
        %v1671 = vpop.permute.xlu0 %1670
        %1672 = vrot.lane.b32.xlu0 %v1651, 24
        %v1673 = vpop.permute.xlu0 %1672
        %1674 = vrot.lane.b32.xlu0 %v1652, 24
        %v1675 = vpop.permute.xlu0 %1674
        %1676 = vrot.lane.b32.xlu0 %v1653, 24
        %v1677 = vpop.permute.xlu0 %1676
        %1678 = vrot.lane.b32.xlu0 %v1654, 24
        %v1679 = vpop.permute.xlu0 %1678
        %1680 = vrot.lane.b32.xlu0 %v1655, 24
        %v1681 = vpop.permute.xlu0 %1680
        %1682 = vrot.lane.b32.xlu0 %v1656, 24
        %v1683 = vpop.permute.xlu0 %1682
        %1684 = vrot.lane.b32.xlu0 %v1657, 24
        %v1685 = vpop.permute.xlu0 %1684
        %1686 = vrot.lane.b32.xlu0 %v1658, 24
        %v1687 = vpop.permute.xlu0 %1686
        %1688 = vrot.lane.b32.xlu0 %v1659, 24
        %v1689 = vpop.permute.xlu0 %1688
        %1690 = vrot.lane.b32.xlu0 %v1660, 24
        %v1691 = vpop.permute.xlu0 %1690
        %1692 = vrot.lane.b32.xlu0 %v1661, 24
        %v1693 = vpop.permute.xlu0 %1692
        %v1710 = vunpack.c.l.b16 %v556
        %v1711 = vunpack.c.l.b16 %v557
        %v1712 = vunpack.c.l.b16 %v558
        %v1713 = vunpack.c.l.b16 %v559
        %v1714 = vunpack.c.l.b16 %v560
        %v1715 = vunpack.c.l.b16 %v561
        %v1716 = vunpack.c.l.b16 %v562
        %v1717 = vunpack.c.l.b16 %v563
        %v1718 = vunpack.c.l.b16 %v564
        %v1719 = vunpack.c.l.b16 %v565
        %v1720 = vunpack.c.l.b16 %v566
        %v1721 = vunpack.c.l.b16 %v567
        %v1722 = vunpack.c.l.b16 %v568
        %v1723 = vunpack.c.l.b16 %v569
        %v1724 = vunpack.c.l.b16 %v570
        %v1725 = vunpack.c.l.b16 %v571
        %v1726 = vpack.c.b16 %v1710, %v1710
        %v1727 = vpack.c.b16 %v1711, %v1711
        %v1728 = vpack.c.b16 %v1712, %v1712
        %v1729 = vpack.c.b16 %v1713, %v1713
        %v1730 = vpack.c.b16 %v1714, %v1714
        %v1731 = vpack.c.b16 %v1715, %v1715
        %v1732 = vpack.c.b16 %v1716, %v1716
        %v1733 = vpack.c.b16 %v1717, %v1717
        %v1734 = vpack.c.b16 %v1718, %v1718
        %v1735 = vpack.c.b16 %v1719, %v1719
        %v1736 = vpack.c.b16 %v1720, %v1720
        %v1737 = vpack.c.b16 %v1721, %v1721
        %v1738 = vpack.c.b16 %v1722, %v1722
        %v1739 = vpack.c.b16 %v1723, %v1723
        %v1740 = vpack.c.b16 %v1724, %v1724
        %v1741 = vpack.c.b16 %v1725, %v1725
        %v1743 = vshrl.u32 %v1646, 16
        %v1745 = vshll.u32 %v1646, 16
        %v1747 = vrot.slane %v1745, 1
        %v1748 = vor.u32 %v1743, %v1747
        %v1750 = vshll.u32 %v1726, 16
        %v1752 = vrot.slane %v1750, 1
        %v1753 = vsel %vm716, %v1748, %v1752
        %v1755 = vshrl.u32 %v1647, 16
        %v1757 = vshll.u32 %v1647, 16
        %v1759 = vrot.slane %v1757, 1
        %v1760 = vor.u32 %v1755, %v1759
        %v1762 = vshll.u32 %v1727, 16
        %v1764 = vrot.slane %v1762, 1
        %v1765 = vsel %vm716, %v1760, %v1764
        %v1767 = vshrl.u32 %v1648, 16
        %v1769 = vshll.u32 %v1648, 16
        %v1771 = vrot.slane %v1769, 1
        %v1772 = vor.u32 %v1767, %v1771
        %v1774 = vshll.u32 %v1728, 16
        %v1776 = vrot.slane %v1774, 1
        %v1777 = vsel %vm716, %v1772, %v1776
        %v1779 = vshrl.u32 %v1649, 16
        %v1781 = vshll.u32 %v1649, 16
        %v1783 = vrot.slane %v1781, 1
        %v1784 = vor.u32 %v1779, %v1783
        %v1786 = vshll.u32 %v1729, 16
        %v1788 = vrot.slane %v1786, 1
        %v1789 = vsel %vm716, %v1784, %v1788
        %v1791 = vshrl.u32 %v1650, 16
        %v1793 = vshll.u32 %v1650, 16
        %v1795 = vrot.slane %v1793, 1
        %v1796 = vor.u32 %v1791, %v1795
        %v1798 = vshll.u32 %v1730, 16
        %v1800 = vrot.slane %v1798, 1
        %v1801 = vsel %vm716, %v1796, %v1800
        %v1803 = vshrl.u32 %v1651, 16
        %v1805 = vshll.u32 %v1651, 16
        %v1807 = vrot.slane %v1805, 1
        %v1808 = vor.u32 %v1803, %v1807
        %v1810 = vshll.u32 %v1731, 16
        %v1812 = vrot.slane %v1810, 1
        %v1813 = vsel %vm716, %v1808, %v1812
        %v1815 = vshrl.u32 %v1652, 16
        %v1817 = vshll.u32 %v1652, 16
        %v1819 = vrot.slane %v1817, 1
        %v1820 = vor.u32 %v1815, %v1819
        %v1822 = vshll.u32 %v1732, 16
        %v1824 = vrot.slane %v1822, 1
        %v1825 = vsel %vm716, %v1820, %v1824
        %v1827 = vshrl.u32 %v1653, 16
        %v1829 = vshll.u32 %v1653, 16
        %v1831 = vrot.slane %v1829, 1
        %v1832 = vor.u32 %v1827, %v1831
        %v1834 = vshll.u32 %v1733, 16
        %v1836 = vrot.slane %v1834, 1
        %v1837 = vsel %vm716, %v1832, %v1836
        %v1839 = vshrl.u32 %v1654, 16
        %v1841 = vshll.u32 %v1654, 16
        %v1843 = vrot.slane %v1841, 1
        %v1844 = vor.u32 %v1839, %v1843
        %v1846 = vshll.u32 %v1734, 16
        %v1848 = vrot.slane %v1846, 1
        %v1849 = vsel %vm716, %v1844, %v1848
        %v1851 = vshrl.u32 %v1655, 16
        %v1853 = vshll.u32 %v1655, 16
        %v1855 = vrot.slane %v1853, 1
        %v1856 = vor.u32 %v1851, %v1855
        %v1858 = vshll.u32 %v1735, 16
        %v1860 = vrot.slane %v1858, 1
        %v1861 = vsel %vm716, %v1856, %v1860
        %v1863 = vshrl.u32 %v1656, 16
        %v1865 = vshll.u32 %v1656, 16
        %v1867 = vrot.slane %v1865, 1
        %v1868 = vor.u32 %v1863, %v1867
        %v1870 = vshll.u32 %v1736, 16
        %v1872 = vrot.slane %v1870, 1
        %v1873 = vsel %vm716, %v1868, %v1872
        %v1875 = vshrl.u32 %v1657, 16
        %v1877 = vshll.u32 %v1657, 16
        %v1879 = vrot.slane %v1877, 1
        %v1880 = vor.u32 %v1875, %v1879
        %v1882 = vshll.u32 %v1737, 16
        %v1884 = vrot.slane %v1882, 1
        %v1885 = vsel %vm716, %v1880, %v1884
        %v1887 = vshrl.u32 %v1658, 16
        %v1889 = vshll.u32 %v1658, 16
        %v1891 = vrot.slane %v1889, 1
        %v1892 = vor.u32 %v1887, %v1891
        %v1894 = vshll.u32 %v1738, 16
        %v1896 = vrot.slane %v1894, 1
        %v1897 = vsel %vm716, %v1892, %v1896
        %v1899 = vshrl.u32 %v1659, 16
        %v1901 = vshll.u32 %v1659, 16
        %v1903 = vrot.slane %v1901, 1
        %v1904 = vor.u32 %v1899, %v1903
        %v1906 = vshll.u32 %v1739, 16
        %v1908 = vrot.slane %v1906, 1
        %v1909 = vsel %vm716, %v1904, %v1908
        %v1911 = vshrl.u32 %v1660, 16
        %v1913 = vshll.u32 %v1660, 16
        %v1915 = vrot.slane %v1913, 1
        %v1916 = vor.u32 %v1911, %v1915
        %v1918 = vshll.u32 %v1740, 16
        %v1920 = vrot.slane %v1918, 1
        %v1921 = vsel %vm716, %v1916, %v1920
        %v1923 = vshrl.u32 %v1661, 16
        %v1925 = vshll.u32 %v1661, 16
        %v1927 = vrot.slane %v1925, 1
        %v1928 = vor.u32 %v1923, %v1927
        %v1930 = vshll.u32 %v1741, 16
        %v1932 = vrot.slane %v1930, 1
        %v1933 = vsel %vm716, %v1928, %v1932
        %1934 = vrot.lane.b32.xlu0 %v1753, 28
        %v1935 = vpop.permute.xlu0 %1934
        %1936 = vrot.lane.b32.xlu0 %v1765, 28
        %v1937 = vpop.permute.xlu0 %1936
        %1938 = vrot.lane.b32.xlu0 %v1777, 28
        %v1939 = vpop.permute.xlu0 %1938
        %1940 = vrot.lane.b32.xlu0 %v1789, 28
        %v1941 = vpop.permute.xlu0 %1940
        %1942 = vrot.lane.b32.xlu0 %v1801, 28
        %v1943 = vpop.permute.xlu0 %1942
        %1944 = vrot.lane.b32.xlu0 %v1813, 28
        %v1945 = vpop.permute.xlu0 %1944
        %1946 = vrot.lane.b32.xlu0 %v1825, 28
        %v1947 = vpop.permute.xlu0 %1946
        %1948 = vrot.lane.b32.xlu0 %v1837, 28
        %v1949 = vpop.permute.xlu0 %1948
        %1950 = vrot.lane.b32.xlu0 %v1849, 28
        %v1951 = vpop.permute.xlu0 %1950
        %1952 = vrot.lane.b32.xlu0 %v1861, 28
        %v1953 = vpop.permute.xlu0 %1952
        %1954 = vrot.lane.b32.xlu0 %v1873, 28
        %v1955 = vpop.permute.xlu0 %1954
        %1956 = vrot.lane.b32.xlu0 %v1885, 28
        %v1957 = vpop.permute.xlu0 %1956
        %1958 = vrot.lane.b32.xlu0 %v1897, 28
        %v1959 = vpop.permute.xlu0 %1958
        %1960 = vrot.lane.b32.xlu0 %v1909, 28
        %v1961 = vpop.permute.xlu0 %1960
        %1962 = vrot.lane.b32.xlu0 %v1921, 28
        %v1963 = vpop.permute.xlu0 %1962
        %1964 = vrot.lane.b32.xlu0 %v1933, 28
        %v1965 = vpop.permute.xlu0 %1964
        %v1982 = vunpack.c.l.b16 %v572
        %v1983 = vunpack.c.l.b16 %v573
        %v1984 = vunpack.c.l.b16 %v574
        %v1985 = vunpack.c.l.b16 %v575
        %v1986 = vunpack.c.l.b16 %v576
        %v1987 = vunpack.c.l.b16 %v577
        %v1988 = vunpack.c.l.b16 %v578
        %v1989 = vunpack.c.l.b16 %v579
        %v1990 = vunpack.c.l.b16 %v580
        %v1991 = vunpack.c.l.b16 %v581
        %v1992 = vunpack.c.l.b16 %v582
        %v1993 = vunpack.c.l.b16 %v583
        %v1994 = vunpack.c.l.b16 %v584
        %v1995 = vunpack.c.l.b16 %v585
        %v1996 = vunpack.c.l.b16 %v586
        %v1997 = vunpack.c.l.b16 %v587
        %v1998 = vpack.c.b16 %v1615, %v1982
        %v1999 = vpack.c.b16 %v1617, %v1983
        %v2000 = vpack.c.b16 %v1619, %v1984
        %v2001 = vpack.c.b16 %v1621, %v1985
        %v2002 = vpack.c.b16 %v1623, %v1986
        %v2003 = vpack.c.b16 %v1625, %v1987
        %v2004 = vpack.c.b16 %v1627, %v1988
        %v2005 = vpack.c.b16 %v1629, %v1989
        %v2006 = vpack.c.b16 %v1631, %v1990
        %v2007 = vpack.c.b16 %v1633, %v1991
        %v2008 = vpack.c.b16 %v1635, %v1992
        %v2009 = vpack.c.b16 %v1637, %v1993
        %v2010 = vpack.c.b16 %v1639, %v1994
        %v2011 = vpack.c.b16 %v1641, %v1995
        %v2012 = vpack.c.b16 %v1643, %v1996
        %v2013 = vpack.c.b16 %v1645, %v1997
        %v2014 = vrot.slane %v1998, 1
        %v2015 = vrot.slane %v1726, 1
        %v2016 = vsel %vm989, %v2014, %v2015
        %v2017 = vrot.slane %v1999, 1
        %v2018 = vrot.slane %v1727, 1
        %v2019 = vsel %vm989, %v2017, %v2018
        %v2020 = vrot.slane %v2000, 1
        %v2021 = vrot.slane %v1728, 1
        %v2022 = vsel %vm989, %v2020, %v2021
        %v2023 = vrot.slane %v2001, 1
        %v2024 = vrot.slane %v1729, 1
        %v2025 = vsel %vm989, %v2023, %v2024
        %v2026 = vrot.slane %v2002, 1
        %v2027 = vrot.slane %v1730, 1
        %v2028 = vsel %vm989, %v2026, %v2027
        %v2029 = vrot.slane %v2003, 1
        %v2030 = vrot.slane %v1731, 1
        %v2031 = vsel %vm989, %v2029, %v2030
        %v2032 = vrot.slane %v2004, 1
        %v2033 = vrot.slane %v1732, 1
        %v2034 = vsel %vm989, %v2032, %v2033
        %v2035 = vrot.slane %v2005, 1
        %v2036 = vrot.slane %v1733, 1
        %v2037 = vsel %vm989, %v2035, %v2036
        %v2038 = vrot.slane %v2006, 1
        %v2039 = vrot.slane %v1734, 1
        %v2040 = vsel %vm989, %v2038, %v2039
        %v2041 = vrot.slane %v2007, 1
        %v2042 = vrot.slane %v1735, 1
        %v2043 = vsel %vm989, %v2041, %v2042
        %v2044 = vrot.slane %v2008, 1
        %v2045 = vrot.slane %v1736, 1
        %v2046 = vsel %vm989, %v2044, %v2045
        %v2047 = vrot.slane %v2009, 1
        %v2048 = vrot.slane %v1737, 1
        %v2049 = vsel %vm989, %v2047, %v2048
        %v2050 = vrot.slane %v2010, 1
        %v2051 = vrot.slane %v1738, 1
        %v2052 = vsel %vm989, %v2050, %v2051
        %v2053 = vrot.slane %v2011, 1
        %v2054 = vrot.slane %v1739, 1
        %v2055 = vsel %vm989, %v2053, %v2054
        %v2056 = vrot.slane %v2012, 1
        %v2057 = vrot.slane %v1740, 1
        %v2058 = vsel %vm989, %v2056, %v2057
        %v2059 = vrot.slane %v2013, 1
        %v2060 = vrot.slane %v1741, 1
        %v2061 = vsel %vm989, %v2059, %v2060
        %2062 = vrot.lane.b32.xlu0 %v2016, 32
        %v2063 = vpop.permute.xlu0 %2062
        %2064 = vrot.lane.b32.xlu0 %v2019, 32
        %v2065 = vpop.permute.xlu0 %2064
        %2066 = vrot.lane.b32.xlu0 %v2022, 32
        %v2067 = vpop.permute.xlu0 %2066
        %2068 = vrot.lane.b32.xlu0 %v2025, 32
        %v2069 = vpop.permute.xlu0 %2068
        %2070 = vrot.lane.b32.xlu0 %v2028, 32
        %v2071 = vpop.permute.xlu0 %2070
        %2072 = vrot.lane.b32.xlu0 %v2031, 32
        %v2073 = vpop.permute.xlu0 %2072
        %2074 = vrot.lane.b32.xlu0 %v2034, 32
        %v2075 = vpop.permute.xlu0 %2074
        %2076 = vrot.lane.b32.xlu0 %v2037, 32
        %v2077 = vpop.permute.xlu0 %2076
        %2078 = vrot.lane.b32.xlu0 %v2040, 32
        %v2079 = vpop.permute.xlu0 %2078
        %2080 = vrot.lane.b32.xlu0 %v2043, 32
        %v2081 = vpop.permute.xlu0 %2080
        %2082 = vrot.lane.b32.xlu0 %v2046, 32
        %v2083 = vpop.permute.xlu0 %2082
        %2084 = vrot.lane.b32.xlu0 %v2049, 32
        %v2085 = vpop.permute.xlu0 %2084
        %2086 = vrot.lane.b32.xlu0 %v2052, 32
        %v2087 = vpop.permute.xlu0 %2086
        %2088 = vrot.lane.b32.xlu0 %v2055, 32
        %v2089 = vpop.permute.xlu0 %2088
        %2090 = vrot.lane.b32.xlu0 %v2058, 32
        %v2091 = vpop.permute.xlu0 %2090
        %2092 = vrot.lane.b32.xlu0 %v2061, 32
        %v2093 = vpop.permute.xlu0 %2092
        %vm2094 = vcmask 31744
        %v2096 = vsel %vm2094, %v652, %v910
        %v2098 = vsel %vm2094, %v653, %v912
        %v2100 = vsel %vm2094, %v654, %v914
        %v2102 = vsel %vm2094, %v655, %v916
        %v2104 = vsel %vm2094, %v656, %v918
        %v2106 = vsel %vm2094, %v657, %v920
        %v2108 = vsel %vm2094, %v658, %v922
        %v2110 = vsel %vm2094, %v659, %v924
        %v2112 = vsel %vm2094, %v660, %v926
        %v2114 = vsel %vm2094, %v661, %v928
        %v2116 = vsel %vm2094, %v662, %v930
        %v2118 = vsel %vm2094, %v663, %v932
        %v2120 = vsel %vm2094, %v664, %v934
        %v2122 = vsel %vm2094, %v665, %v936
        %v2124 = vsel %vm2094, %v666, %v938
        %v2126 = vsel %vm2094, %v667, %v940
        %vm2127 = vcmask 64512
        %v2129 = vsel %vm2127, %v2096, %v1039
        %v2131 = vsel %vm2127, %v2098, %v1041
        %v2133 = vsel %vm2127, %v2100, %v1043
        %v2135 = vsel %vm2127, %v2102, %v1045
        %v2137 = vsel %vm2127, %v2104, %v1047
        %v2139 = vsel %vm2127, %v2106, %v1049
        %v2141 = vsel %vm2127, %v2108, %v1051
        %v2143 = vsel %vm2127, %v2110, %v1053
        %v2145 = vsel %vm2127, %v2112, %v1055
        %v2147 = vsel %vm2127, %v2114, %v1057
        %v2149 = vsel %vm2127, %v2116, %v1059
        %v2151 = vsel %vm2127, %v2118, %v1061
        %v2153 = vsel %vm2127, %v2120, %v1063
        %v2155 = vsel %vm2127, %v2122, %v1065
        %v2157 = vsel %vm2127, %v2124, %v1067
        %v2159 = vsel %vm2127, %v2126, %v1069
        %vm2160 = vcmask 97280
        %v2162 = vsel %vm2160, %v2129, %v1151
        %v2164 = vsel %vm2160, %v2131, %v1153
        %v2166 = vsel %vm2160, %v2133, %v1155
        %v2168 = vsel %vm2160, %v2135, %v1157
        %v2170 = vsel %vm2160, %v2137, %v1159
        %v2172 = vsel %vm2160, %v2139, %v1161
        %v2174 = vsel %vm2160, %v2141, %v1163
        %v2176 = vsel %vm2160, %v2143, %v1165
        %v2178 = vsel %vm2160, %v2145, %v1167
        %v2180 = vsel %vm2160, %v2147, %v1169
        %v2182 = vsel %vm2160, %v2149, %v1171
        %v2184 = vsel %vm2160, %v2151, %v1173
        %v2186 = vsel %vm2160, %v2153, %v1175
        %v2188 = vsel %vm2160, %v2155, %v1177
        %v2190 = vsel %vm2160, %v2157, %v1179
        %v2192 = vsel %vm2160, %v2159, %v1181
        %vm2193 = vcmask 130048
        %v2195 = vsel %vm2193, %v2162, %v1423
        %v2197 = vsel %vm2193, %v2164, %v1425
        %v2199 = vsel %vm2193, %v2166, %v1427
        %v2201 = vsel %vm2193, %v2168, %v1429
        %v2203 = vsel %vm2193, %v2170, %v1431
        %v2205 = vsel %vm2193, %v2172, %v1433
        %v2207 = vsel %vm2193, %v2174, %v1435
        %v2209 = vsel %vm2193, %v2176, %v1437
        %v2211 = vsel %vm2193, %v2178, %v1439
        %v2213 = vsel %vm2193, %v2180, %v1441
        %v2215 = vsel %vm2193, %v2182, %v1443
        %v2217 = vsel %vm2193, %v2184, %v1445
        %v2219 = vsel %vm2193, %v2186, %v1447
        %v2221 = vsel %vm2193, %v2188, %v1449
        %v2223 = vsel %vm2193, %v2190, %v1451
        %v2225 = vsel %vm2193, %v2192, %v1453
        %vm2226 = vcmask 162816
        %v2228 = vsel %vm2226, %v2195, %v1551
        %v2230 = vsel %vm2226, %v2197, %v1553
        %v2232 = vsel %vm2226, %v2199, %v1555
        %v2234 = vsel %vm2226, %v2201, %v1557
        %v2236 = vsel %vm2226, %v2203, %v1559
        %v2238 = vsel %vm2226, %v2205, %v1561
        %v2240 = vsel %vm2226, %v2207, %v1563
        %v2242 = vsel %vm2226, %v2209, %v1565
        %v2244 = vsel %vm2226, %v2211, %v1567
        %v2246 = vsel %vm2226, %v2213, %v1569
        %v2248 = vsel %vm2226, %v2215, %v1571
        %v2250 = vsel %vm2226, %v2217, %v1573
        %v2252 = vsel %vm2226, %v2219, %v1575
        %v2254 = vsel %vm2226, %v2221, %v1577
        %v2256 = vsel %vm2226, %v2223, %v1579
        %v2258 = vsel %vm2226, %v2225, %v1581
        %vm2259 = vcmask 195584
        %v2261 = vsel %vm2259, %v2228, %v1663
        %v2263 = vsel %vm2259, %v2230, %v1665
        %v2265 = vsel %vm2259, %v2232, %v1667
        %v2267 = vsel %vm2259, %v2234, %v1669
        %v2269 = vsel %vm2259, %v2236, %v1671
        %v2271 = vsel %vm2259, %v2238, %v1673
        %v2273 = vsel %vm2259, %v2240, %v1675
        %v2275 = vsel %vm2259, %v2242, %v1677
        %v2277 = vsel %vm2259, %v2244, %v1679
        %v2279 = vsel %vm2259, %v2246, %v1681
        %v2281 = vsel %vm2259, %v2248, %v1683
        %v2283 = vsel %vm2259, %v2250, %v1685
        %v2285 = vsel %vm2259, %v2252, %v1687
        %v2287 = vsel %vm2259, %v2254, %v1689
        %v2289 = vsel %vm2259, %v2256, %v1691
        %v2291 = vsel %vm2259, %v2258, %v1693
        %vm2292 = vcmask 228352
        %v2294 = vsel %vm2292, %v2261, %v1935
        %v2296 = vsel %vm2292, %v2263, %v1937
        %v2298 = vsel %vm2292, %v2265, %v1939
        %v2300 = vsel %vm2292, %v2267, %v1941
        %v2302 = vsel %vm2292, %v2269, %v1943
        %v2304 = vsel %vm2292, %v2271, %v1945
        %v2306 = vsel %vm2292, %v2273, %v1947
        %v2308 = vsel %vm2292, %v2275, %v1949
        %v2310 = vsel %vm2292, %v2277, %v1951
        %v2312 = vsel %vm2292, %v2279, %v1953
        %v2314 = vsel %vm2292, %v2281, %v1955
        %v2316 = vsel %vm2292, %v2283, %v1957
        %v2318 = vsel %vm2292, %v2285, %v1959
        %v2320 = vsel %vm2292, %v2287, %v1961
        %v2322 = vsel %vm2292, %v2289, %v1963
        %v2324 = vsel %vm2292, %v2291, %v1965
        %vm2325 = vcmask 261120
        %v2327 = vsel %vm2325, %v2294, %v2063
        %v2329 = vsel %vm2325, %v2296, %v2065
        %v2331 = vsel %vm2325, %v2298, %v2067
        %v2333 = vsel %vm2325, %v2300, %v2069
        %v2335 = vsel %vm2325, %v2302, %v2071
        %v2337 = vsel %vm2325, %v2304, %v2073
        %v2339 = vsel %vm2325, %v2306, %v2075
        %v2341 = vsel %vm2325, %v2308, %v2077
        %v2343 = vsel %vm2325, %v2310, %v2079
        %v2345 = vsel %vm2325, %v2312, %v2081
        %v2347 = vsel %vm2325, %v2314, %v2083
        %v2349 = vsel %vm2325, %v2316, %v2085
        %v2351 = vsel %vm2325, %v2318, %v2087
        %v2353 = vsel %vm2325, %v2320, %v2089
        %v2355 = vsel %vm2325, %v2322, %v2091
        %v2357 = vsel %vm2325, %v2324, %v2093
        %v2358 = vld [vmem:[#allocation5] sm:$0xf]
        %v2359 = vld [vmem:[#allocation5 + $0x4] sm:$0xf]
        %v2360 = vld [vmem:[#allocation5 + $0x8] sm:$0xf]
        %v2361 = vld [vmem:[#allocation5 + $0xc] sm:$0xf]
        %v2362 = vld [vmem:[#allocation5 + $0x10] sm:$0x3]
        %v2363 = vld [vmem:[#allocation7] sm:$0x1]
        %v2365 = vlaneseq
        %v2366 = vshrl.u32 %v2365, 7
        %v2367 = vsub.s32 0, %v2366
        %v2368 = vrot.slane %v2363, %v2367
        %v2375 = vunpack.c.l.b16 %v2358
        %v2376 = vunpack.c.l.b16 %v2359
        %v2377 = vunpack.c.l.b16 %v2360
        %v2378 = vunpack.c.l.b16 %v2361
        %v2379 = vunpack.c.l.b16 %v2362
        %v2380 = vpack.c.b16 %v2376, %v2375
        %v2381 = vpack.c.b16 %v2378, %v2377
        %v2382 = vpack.c.b16 %v2379, %v2379
        %vm2385 = vcmask 293888
        %v2386 = vsel %vm2385, %v2327, 0
        %v2388 = vsel %vm2385, %v2329, 0
        %v2390 = vsel %vm2385, %v2331, 0
        %v2392 = vsel %vm2385, %v2333, 0
        %v2394 = vsel %vm2385, %v2335, 0
        %v2396 = vsel %vm2385, %v2337, 0
        %v2398 = vsel %vm2385, %v2339, 0
        %v2400 = vsel %vm2385, %v2341, 0
        %v2402 = vsel %vm2385, %v2343, 0
        %v2404 = vsel %vm2385, %v2345, 0
        %v2406 = vsel %vm2385, %v2347, 0
        %v2408 = vsel %vm2385, %v2349, 0
        %v2410 = vsel %vm2385, %v2351, 0
        %v2412 = vsel %vm2385, %v2353, 0
        %v2414 = vsel %vm2385, %v2355, 0
        %v2416 = vsel %vm2385, %v2357, 0
        %vm2418 = vcmask 1041408
        %v2420 = vsel %vm2418, %v2382, 0
        %2422 = vmatprep.subr.bf16.mxu0 0
        %2423 = vmatpush1.bf16.msra.mxu0 %v2380
        %2424 = vmatprep.subr.bf16.mxu0 0
        %2425 = vmatpush1.bf16.msra.mxu0 %v2381
        %2426 = vmatprep.subr.bf16.mxu0 0
        %2427 = vmatpush1.bf16.msra.mxu0 %v2420
        %2428 = vmatprep.subr.bf16.mxu0 0
        %2429 = vmatpush1.bf16.msra.mxu0 0
        %2430 = vmatprep.subr.bf16.mxu0 0
        %2431 = vmatpush1.bf16.msra.mxu0 0
        %2432 = vmatprep.subr.bf16.mxu0 0
        %2433 = vmatpush1.bf16.msra.mxu0 0
        %2434 = vmatprep.subr.bf16.mxu0 0
        %2435 = vmatpush1.bf16.msra.mxu0 0
        %2436 = vmatprep.subr.bf16.mxu0 0
        %2437 = vmatpush1.bf16.msra.mxu0 0
        %2438 = vmatprep.subr.bf16.mxu0 0
        %2439 = vmatpush1.bf16.msra.mxu0 0
        %2440 = vmatprep.subr.bf16.mxu0 0
        %2441 = vmatpush1.bf16.msra.mxu0 0
        %2442 = vmatprep.subr.bf16.mxu0 0
        %2443 = vmatpush1.bf16.msra.mxu0 0
        %2444 = vmatprep.subr.bf16.mxu0 0
        %2445 = vmatpush1.bf16.msra.mxu0 0
        %2446 = vmatprep.subr.bf16.mxu0 0
        %2447 = vmatpush1.bf16.msra.mxu0 0
        %2448 = vmatprep.subr.bf16.mxu0 0
        %2449 = vmatpush1.bf16.msra.mxu0 0
        %2450 = vmatprep.subr.bf16.mxu0 0
        %2451 = vmatpush1.bf16.msra.mxu0 0
        %2452 = vmatprep.subr.bf16.mxu0 0
        %2453 = vmatpush1.bf16.msra.mxu0 0
        %2454 = vmatprep.mubr.bf16.mxu0 0
        %2455 = vmatmul.mubr.bf16.gmra.mrb[0].mxu0 %v2386
        %v2456 = vpop.f32.mrb[0].mxu0
        %v2457 = vadd.f32 %v2368, %v2456
        %v2458 = vpop.f32.mrb[0].mxu0
        %v2459 = vpop.f32.mrb[0].mxu0
        %v2460 = vadd.f32 %v2368, %v2459
        %v2461 = vpop.f32.mrb[0].mxu0
        %2462 = vmatprep.mubr.bf16.mxu0 0
        %2463 = vmatmul.mubr.bf16.gmra.mrb[0].mxu0 %v2388
        %v2464 = vpop.f32.mrb[0].mxu0
        %v2465 = vadd.f32 %v2368, %v2464
        %v2466 = vpop.f32.mrb[0].mxu0
        %v2467 = vpop.f32.mrb[0].mxu0
        %v2468 = vadd.f32 %v2368, %v2467
        %v2469 = vpop.f32.mrb[0].mxu0
        %2470 = vmatprep.mubr.bf16.mxu0 0
        %2471 = vmatmul.mubr.bf16.gmra.mrb[0].mxu0 %v2390
        %v2472 = vpop.f32.mrb[0].mxu0
        %v2473 = vadd.f32 %v2368, %v2472
        %v2474 = vpop.f32.mrb[0].mxu0
        %v2475 = vpop.f32.mrb[0].mxu0
        %v2476 = vadd.f32 %v2368, %v2475
        %v2477 = vpop.f32.mrb[0].mxu0
        %2478 = vmatprep.mubr.bf16.mxu0 0
        %2479 = vmatmul.mubr.bf16.gmra.mrb[0].mxu0 %v2392
        %v2480 = vpop.f32.mrb[0].mxu0
        %v2481 = vadd.f32 %v2368, %v2480
        %v2482 = vpop.f32.mrb[0].mxu0
        %v2483 = vpop.f32.mrb[0].mxu0
        %v2484 = vadd.f32 %v2368, %v2483
        %v2485 = vpop.f32.mrb[0].mxu0
        %2486 = vmatprep.mubr.bf16.mxu0 0
        %2487 = vmatmul.mubr.bf16.gmra.mrb[0].mxu0 %v2394
        %v2488 = vpop.f32.mrb[0].mxu0
        %v2489 = vadd.f32 %v2368, %v2488
        %v2490 = vpop.f32.mrb[0].mxu0
        %v2491 = vpop.f32.mrb[0].mxu0
        %v2492 = vadd.f32 %v2368, %v2491
        %v2493 = vpop.f32.mrb[0].mxu0
        %2494 = vmatprep.mubr.bf16.mxu0 0
        %2495 = vmatmul.mubr.bf16.gmra.mrb[0].mxu0 %v2396
        %v2496 = vpop.f32.mrb[0].mxu0
        %v2497 = vadd.f32 %v2368, %v2496
        %v2498 = vpop.f32.mrb[0].mxu0
        %v2499 = vpop.f32.mrb[0].mxu0
        %v2500 = vadd.f32 %v2368, %v2499
        %v2501 = vpop.f32.mrb[0].mxu0
        %2502 = vmatprep.mubr.bf16.mxu0 0
        %2503 = vmatmul.mubr.bf16.gmra.mrb[0].mxu0 %v2398
        %v2504 = vpop.f32.mrb[0].mxu0
        %v2505 = vadd.f32 %v2368, %v2504
        %v2506 = vpop.f32.mrb[0].mxu0
        %v2507 = vpop.f32.mrb[0].mxu0
        %v2508 = vadd.f32 %v2368, %v2507
        %v2509 = vpop.f32.mrb[0].mxu0
        %2510 = vmatprep.mubr.bf16.mxu0 0
        %2511 = vmatmul.mubr.bf16.gmra.mrb[0].mxu0 %v2400
        %v2512 = vpop.f32.mrb[0].mxu0
        %v2513 = vadd.f32 %v2368, %v2512
        %v2514 = vpop.f32.mrb[0].mxu0
        %v2515 = vpop.f32.mrb[0].mxu0
        %v2516 = vadd.f32 %v2368, %v2515
        %v2517 = vpop.f32.mrb[0].mxu0
        %2518 = vmatprep.mubr.bf16.mxu0 0
        %2519 = vmatmul.mubr.bf16.gmra.mrb[0].mxu0 %v2402
        %v2520 = vpop.f32.mrb[0].mxu0
        %v2521 = vadd.f32 %v2368, %v2520
        %v2522 = vpop.f32.mrb[0].mxu0
        %v2523 = vpop.f32.mrb[0].mxu0
        %v2524 = vadd.f32 %v2368, %v2523
        %v2525 = vpop.f32.mrb[0].mxu0
        %2526 = vmatprep.mubr.bf16.mxu0 0
        %2527 = vmatmul.mubr.bf16.gmra.mrb[0].mxu0 %v2404
        %v2528 = vpop.f32.mrb[0].mxu0
        %v2529 = vadd.f32 %v2368, %v2528
        %v2530 = vpop.f32.mrb[0].mxu0
        %v2531 = vpop.f32.mrb[0].mxu0
        %v2532 = vadd.f32 %v2368, %v2531
        %v2533 = vpop.f32.mrb[0].mxu0
        %2534 = vmatprep.mubr.bf16.mxu0 0
        %2535 = vmatmul.mubr.bf16.gmra.mrb[0].mxu0 %v2406
        %v2536 = vpop.f32.mrb[0].mxu0
        %v2537 = vadd.f32 %v2368, %v2536
        %v2538 = vpop.f32.mrb[0].mxu0
        %v2539 = vpop.f32.mrb[0].mxu0
        %v2540 = vadd.f32 %v2368, %v2539
        %v2541 = vpop.f32.mrb[0].mxu0
        %2542 = vmatprep.mubr.bf16.mxu0 0
        %2543 = vmatmul.mubr.bf16.gmra.mrb[0].mxu0 %v2408
        %v2544 = vpop.f32.mrb[0].mxu0
        %v2545 = vadd.f32 %v2368, %v2544
        %v2546 = vpop.f32.mrb[0].mxu0
        %v2547 = vpop.f32.mrb[0].mxu0
        %v2548 = vadd.f32 %v2368, %v2547
        %v2549 = vpop.f32.mrb[0].mxu0
        %2550 = vmatprep.mubr.bf16.mxu0 0
        %2551 = vmatmul.mubr.bf16.gmra.mrb[0].mxu0 %v2410
        %v2552 = vpop.f32.mrb[0].mxu0
        %v2553 = vadd.f32 %v2368, %v2552
        %v2554 = vpop.f32.mrb[0].mxu0
        %v2555 = vpop.f32.mrb[0].mxu0
        %v2556 = vadd.f32 %v2368, %v2555
        %v2557 = vpop.f32.mrb[0].mxu0
        %2558 = vmatprep.mubr.bf16.mxu0 0
        %2559 = vmatmul.mubr.bf16.gmra.mrb[0].mxu0 %v2412
        %v2560 = vpop.f32.mrb[0].mxu0
        %v2561 = vadd.f32 %v2368, %v2560
        %v2562 = vpop.f32.mrb[0].mxu0
        %v2563 = vpop.f32.mrb[0].mxu0
        %v2564 = vadd.f32 %v2368, %v2563
        %v2565 = vpop.f32.mrb[0].mxu0
        %2566 = vmatprep.mubr.bf16.mxu0 0
        %2567 = vmatmul.mubr.bf16.gmra.mrb[0].mxu0 %v2414
        %v2568 = vpop.f32.mrb[0].mxu0
        %v2569 = vadd.f32 %v2368, %v2568
        %v2570 = vpop.f32.mrb[0].mxu0
        %v2571 = vpop.f32.mrb[0].mxu0
        %v2572 = vadd.f32 %v2368, %v2571
        %v2573 = vpop.f32.mrb[0].mxu0
        %2574 = vmatprep.mubr.bf16.mxu0 0
        %2575 = vmatmul.mubr.bf16.gmra.mrb[0].mxu0 %v2416
        %v2576 = vpop.f32.mrb[0].mxu0
        %v2577 = vadd.f32 %v2368, %v2576
        %v2578 = vpop.f32.mrb[0].mxu0
        %v2579 = vpop.f32.mrb[0].mxu0
        %v2580 = vadd.f32 %v2368, %v2579
        %v2581 = vpop.f32.mrb[0].mxu0
        %2582 = vdwg.mxu0
        %v2583 = vpack.c.bf16 %v2460, %v2457
        %v2584 = vpack.c.bf16 %v2468, %v2465
        %v2585 = vpack.c.bf16 %v2476, %v2473
        %v2586 = vpack.c.bf16 %v2484, %v2481
        %v2587 = vpack.c.bf16 %v2492, %v2489
        %v2588 = vpack.c.bf16 %v2500, %v2497
        %v2589 = vpack.c.bf16 %v2508, %v2505
        %v2590 = vpack.c.bf16 %v2516, %v2513
        %v2591 = vpack.c.bf16 %v2524, %v2521
        %v2592 = vpack.c.bf16 %v2532, %v2529
        %v2593 = vpack.c.bf16 %v2540, %v2537
        %v2594 = vpack.c.bf16 %v2548, %v2545
        %v2595 = vpack.c.bf16 %v2556, %v2553
        %v2596 = vpack.c.bf16 %v2564, %v2561
        %v2597 = vpack.c.bf16 %v2572, %v2569
        %v2598 = vpack.c.bf16 %v2580, %v2577
        %v2599 = vxor.u32 %v2583, 2147516416
        %v2600 = vxor.u32 %v2584, 2147516416
        %v2601 = vxor.u32 %v2585, 2147516416
        %v2602 = vxor.u32 %v2586, 2147516416
        %v2603 = vxor.u32 %v2587, 2147516416
        %v2604 = vxor.u32 %v2588, 2147516416
        %v2605 = vxor.u32 %v2589, 2147516416
        %v2606 = vxor.u32 %v2590, 2147516416
        %v2607 = vxor.u32 %v2591, 2147516416
        %v2608 = vxor.u32 %v2592, 2147516416
        %v2609 = vxor.u32 %v2593, 2147516416
        %v2610 = vxor.u32 %v2594, 2147516416
        %v2611 = vxor.u32 %v2595, 2147516416
        %v2612 = vxor.u32 %v2596, 2147516416
        %v2613 = vxor.u32 %v2597, 2147516416
        %v2614 = vxor.u32 %v2598, 2147516416
        %v2616 = vmul.bf16 %v2599, 1069105081
        %v2617 = vpow.bf16.pop %v2616
        %v2619 = vmul.bf16 %v2600, 1069105081
        %v2620 = vpow.bf16.pop %v2619
        %v2622 = vmul.bf16 %v2601, 1069105081
        %v2623 = vpow.bf16.pop %v2622
        %v2625 = vmul.bf16 %v2602, 1069105081
        %v2626 = vpow.bf16.pop %v2625
        %v2628 = vmul.bf16 %v2603, 1069105081
        %v2629 = vpow.bf16.pop %v2628
        %v2631 = vmul.bf16 %v2604, 1069105081
        %v2632 = vpow.bf16.pop %v2631
        %v2634 = vmul.bf16 %v2605, 1069105081
        %v2635 = vpow.bf16.pop %v2634
        %v2637 = vmul.bf16 %v2606, 1069105081
        %v2638 = vpow.bf16.pop %v2637
        %v2640 = vmul.bf16 %v2607, 1069105081
        %v2641 = vpow.bf16.pop %v2640
        %v2643 = vmul.bf16 %v2608, 1069105081
        %v2644 = vpow.bf16.pop %v2643
        %v2646 = vmul.bf16 %v2609, 1069105081
        %v2647 = vpow.bf16.pop %v2646
        %v2649 = vmul.bf16 %v2610, 1069105081
        %v2650 = vpow.bf16.pop %v2649
        %v2652 = vmul.bf16 %v2611, 1069105081
        %v2653 = vpow.bf16.pop %v2652
        %v2655 = vmul.bf16 %v2612, 1069105081
        %v2656 = vpow.bf16.pop %v2655
        %v2658 = vmul.bf16 %v2613, 1069105081
        %v2659 = vpow.bf16.pop %v2658
        %v2661 = vmul.bf16 %v2614, 1069105081
        %v2662 = vpow.bf16.pop %v2661
        %v2663 = vadd.bf16 %v2617, 1065369472
        %v2664 = vadd.bf16 %v2620, 1065369472
        %v2665 = vadd.bf16 %v2623, 1065369472
        %v2666 = vadd.bf16 %v2626, 1065369472
        %v2667 = vadd.bf16 %v2629, 1065369472
        %v2668 = vadd.bf16 %v2632, 1065369472
        %v2669 = vadd.bf16 %v2635, 1065369472
        %v2670 = vadd.bf16 %v2638, 1065369472
        %v2671 = vadd.bf16 %v2641, 1065369472
        %v2672 = vadd.bf16 %v2644, 1065369472
        %v2673 = vadd.bf16 %v2647, 1065369472
        %v2674 = vadd.bf16 %v2650, 1065369472
        %v2675 = vadd.bf16 %v2653, 1065369472
        %v2676 = vadd.bf16 %v2656, 1065369472
        %v2677 = vadd.bf16 %v2659, 1065369472
        %v2678 = vadd.bf16 %v2662, 1065369472
        %v2679 = vrcp.bf16.pop %v2663
        %v2680 = vmul.bf16 1065369472, %v2679
        %v2681 = vrcp.bf16.pop %v2664
        %v2682 = vmul.bf16 1065369472, %v2681
        %v2683 = vrcp.bf16.pop %v2665
        %v2684 = vmul.bf16 1065369472, %v2683
        %v2685 = vrcp.bf16.pop %v2666
        %v2686 = vmul.bf16 1065369472, %v2685
        %v2687 = vrcp.bf16.pop %v2667
        %v2688 = vmul.bf16 1065369472, %v2687
        %v2689 = vrcp.bf16.pop %v2668
        %v2690 = vmul.bf16 1065369472, %v2689
        %v2691 = vrcp.bf16.pop %v2669
        %v2692 = vmul.bf16 1065369472, %v2691
        %v2693 = vrcp.bf16.pop %v2670
        %v2694 = vmul.bf16 1065369472, %v2693
        %v2695 = vrcp.bf16.pop %v2671
        %v2696 = vmul.bf16 1065369472, %v2695
        %v2697 = vrcp.bf16.pop %v2672
        %v2698 = vmul.bf16 1065369472, %v2697
        %v2699 = vrcp.bf16.pop %v2673
        %v2700 = vmul.bf16 1065369472, %v2699
        %v2701 = vrcp.bf16.pop %v2674
        %v2702 = vmul.bf16 1065369472, %v2701
        %v2703 = vrcp.bf16.pop %v2675
        %v2704 = vmul.bf16 1065369472, %v2703
        %v2705 = vrcp.bf16.pop %v2676
        %v2706 = vmul.bf16 1065369472, %v2705
        %v2707 = vrcp.bf16.pop %v2677
        %v2708 = vmul.bf16 1065369472, %v2707
        %v2709 = vrcp.bf16.pop %v2678
        %v2710 = vmul.bf16 1065369472, %v2709
        %v2711 = vunpack.c.l.bf16 %v2680
        %v2712 = vunpack.c.h.bf16 %v2680
        %v2713 = vunpack.c.l.bf16 %v2682
        %v2714 = vunpack.c.h.bf16 %v2682
        %v2715 = vunpack.c.l.bf16 %v2684
        %v2716 = vunpack.c.h.bf16 %v2684
        %v2717 = vunpack.c.l.bf16 %v2686
        %v2718 = vunpack.c.h.bf16 %v2686
        %v2719 = vunpack.c.l.bf16 %v2688
        %v2720 = vunpack.c.h.bf16 %v2688
        %v2721 = vunpack.c.l.bf16 %v2690
        %v2722 = vunpack.c.h.bf16 %v2690
        %v2723 = vunpack.c.l.bf16 %v2692
        %v2724 = vunpack.c.h.bf16 %v2692
        %v2725 = vunpack.c.l.bf16 %v2694
        %v2726 = vunpack.c.h.bf16 %v2694
        %v2727 = vunpack.c.l.bf16 %v2696
        %v2728 = vunpack.c.h.bf16 %v2696
        %v2729 = vunpack.c.l.bf16 %v2698
        %v2730 = vunpack.c.h.bf16 %v2698
        %v2731 = vunpack.c.l.bf16 %v2700
        %v2732 = vunpack.c.h.bf16 %v2700
        %v2733 = vunpack.c.l.bf16 %v2702
        %v2734 = vunpack.c.h.bf16 %v2702
        %v2735 = vunpack.c.l.bf16 %v2704
        %v2736 = vunpack.c.h.bf16 %v2704
        %v2737 = vunpack.c.l.bf16 %v2706
        %v2738 = vunpack.c.h.bf16 %v2706
        %v2739 = vunpack.c.l.bf16 %v2708
        %v2740 = vunpack.c.h.bf16 %v2708
        %v2741 = vunpack.c.l.bf16 %v2710
        %v2742 = vunpack.c.h.bf16 %v2710
        %v2743 = vmul.f32 %v2457, %v2711
        %v2744 = vmul.f32 %v2460, %v2712
        %v2745 = vmul.f32 %v2465, %v2713
        %v2746 = vmul.f32 %v2468, %v2714
        %v2747 = vmul.f32 %v2473, %v2715
        %v2748 = vmul.f32 %v2476, %v2716
        %v2749 = vmul.f32 %v2481, %v2717
        %v2750 = vmul.f32 %v2484, %v2718
        %v2751 = vmul.f32 %v2489, %v2719
        %v2752 = vmul.f32 %v2492, %v2720
        %v2753 = vmul.f32 %v2497, %v2721
        %v2754 = vmul.f32 %v2500, %v2722
        %v2755 = vmul.f32 %v2505, %v2723
        %v2756 = vmul.f32 %v2508, %v2724
        %v2757 = vmul.f32 %v2513, %v2725
        %v2758 = vmul.f32 %v2516, %v2726
        %v2759 = vmul.f32 %v2521, %v2727
        %v2760 = vmul.f32 %v2524, %v2728
        %v2761 = vmul.f32 %v2529, %v2729
        %v2762 = vmul.f32 %v2532, %v2730
        %v2763 = vmul.f32 %v2537, %v2731
        %v2764 = vmul.f32 %v2540, %v2732
        %v2765 = vmul.f32 %v2545, %v2733
        %v2766 = vmul.f32 %v2548, %v2734
        %v2767 = vmul.f32 %v2553, %v2735
        %v2768 = vmul.f32 %v2556, %v2736
        %v2769 = vmul.f32 %v2561, %v2737
        %v2770 = vmul.f32 %v2564, %v2738
        %v2771 = vmul.f32 %v2569, %v2739
        %v2772 = vmul.f32 %v2572, %v2740
        %v2773 = vmul.f32 %v2577, %v2741
        %v2774 = vmul.f32 %v2580, %v2742
        %v2775 = vpack.c.bf16 %v2744, %v2743
        %v2776 = vpack.c.bf16 %v2746, %v2745
        %v2777 = vpack.c.bf16 %v2748, %v2747
        %v2778 = vpack.c.bf16 %v2750, %v2749
        %v2779 = vpack.c.bf16 %v2752, %v2751
        %v2780 = vpack.c.bf16 %v2754, %v2753
        %v2781 = vpack.c.bf16 %v2756, %v2755
        %v2782 = vpack.c.bf16 %v2758, %v2757
        %v2783 = vpack.c.bf16 %v2760, %v2759
        %v2784 = vpack.c.bf16 %v2762, %v2761
        %v2785 = vpack.c.bf16 %v2764, %v2763
        %v2786 = vpack.c.bf16 %v2766, %v2765
        %v2787 = vpack.c.bf16 %v2768, %v2767
        %v2788 = vpack.c.bf16 %v2770, %v2769
        %v2789 = vpack.c.bf16 %v2772, %v2771
        %v2790 = vpack.c.bf16 %v2774, %v2773
        %v2791 = vld [vmem:[#allocation8] sm:$0xf]
        %v2792 = vld [vmem:[#allocation8 + $0x4] sm:$0xf]
        %v2793 = vld [vmem:[#allocation10] sm:$0x1]
        %v2795 = vlaneseq
        %v2796 = vshrl.u32 %v2795, 7
        %v2797 = vsub.s32 0, %v2796
        %v2798 = vrot.slane %v2793, %v2797
        %v2802 = vunpack.c.l.b16 %v2791
        %v2803 = vunpack.c.l.b16 %v2792
        %v2804 = vpack.c.b16 %v2803, %v2802
        %v2807 = vsel %vm2193, %v2775, 0
        %v2810 = vsel %vm2193, %v2776, 0
        %v2813 = vsel %vm2193, %v2777, 0
        %v2816 = vsel %vm2193, %v2778, 0
        %v2819 = vsel %vm2193, %v2779, 0
        %v2822 = vsel %vm2193, %v2780, 0
        %v2825 = vsel %vm2193, %v2781, 0
        %v2828 = vsel %vm2193, %v2782, 0
        %v2831 = vsel %vm2193, %v2783, 0
        %v2834 = vsel %vm2193, %v2784, 0
        %v2837 = vsel %vm2193, %v2785, 0
        %v2840 = vsel %vm2193, %v2786, 0
        %v2843 = vsel %vm2193, %v2787, 0
        %v2846 = vsel %vm2193, %v2788, 0
        %v2849 = vsel %vm2193, %v2789, 0
        %v2852 = vsel %vm2193, %v2790, 0
        %2854 = vmatprep.subr.bf16.mxu0 0
        %2855 = vmatpush1.bf16.msra.mxu0 %v2804
        %2856 = vmatprep.subr.bf16.mxu0 0
        %2857 = vmatpush1.bf16.msra.mxu0 0
        %2858 = vmatprep.subr.bf16.mxu0 0
        %2859 = vmatpush1.bf16.msra.mxu0 0
        %2860 = vmatprep.subr.bf16.mxu0 0
        %2861 = vmatpush1.bf16.msra.mxu0 0
        %2862 = vmatprep.subr.bf16.mxu0 0
        %2863 = vmatpush1.bf16.msra.mxu0 0
        %2864 = vmatprep.subr.bf16.mxu0 0
        %2865 = vmatpush1.bf16.msra.mxu0 0
        %2866 = vmatprep.subr.bf16.mxu0 0
        %2867 = vmatpush1.bf16.msra.mxu0 0
        %2868 = vmatprep.subr.bf16.mxu0 0
        %2869 = vmatpush1.bf16.msra.mxu0 0
        %2870 = vmatprep.subr.bf16.mxu0 0
        %2871 = vmatpush1.bf16.msra.mxu0 0
        %2872 = vmatprep.subr.bf16.mxu0 0
        %2873 = vmatpush1.bf16.msra.mxu0 0
        %2874 = vmatprep.subr.bf16.mxu0 0
        %2875 = vmatpush1.bf16.msra.mxu0 0
        %2876 = vmatprep.subr.bf16.mxu0 0
        %2877 = vmatpush1.bf16.msra.mxu0 0
        %2878 = vmatprep.subr.bf16.mxu0 0
        %2879 = vmatpush1.bf16.msra.mxu0 0
        %2880 = vmatprep.subr.bf16.mxu0 0
        %2881 = vmatpush1.bf16.msra.mxu0 0
        %2882 = vmatprep.subr.bf16.mxu0 0
        %2883 = vmatpush1.bf16.msra.mxu0 0
        %2884 = vmatprep.subr.bf16.mxu0 0
        %2885 = vmatpush1.bf16.msra.mxu0 0
        %2886 = vmatprep.mubr.bf16.mxu0 0
        %2887 = vmatmul.mubr.bf16.gmra.mrb[0].mxu0 %v2807
        %v2888 = vpop.f32.mrb[0].mxu0
        %v2889 = vadd.f32 %v2798, %v2888
        %v2890 = vpop.f32.mrb[0].mxu0
        %v2891 = vpop.f32.mrb[0].mxu0
        %v2892 = vadd.f32 %v2798, %v2891
        %v2893 = vpop.f32.mrb[0].mxu0
        %2894 = vmatprep.mubr.bf16.mxu0 0
        %2895 = vmatmul.mubr.bf16.gmra.mrb[0].mxu0 %v2810
        %v2896 = vpop.f32.mrb[0].mxu0
        %v2897 = vadd.f32 %v2798, %v2896
        %v2898 = vpop.f32.mrb[0].mxu0
        %v2899 = vpop.f32.mrb[0].mxu0
        %v2900 = vadd.f32 %v2798, %v2899
        %v2901 = vpop.f32.mrb[0].mxu0
        %2902 = vmatprep.mubr.bf16.mxu0 0
        %2903 = vmatmul.mubr.bf16.gmra.mrb[0].mxu0 %v2813
        %v2904 = vpop.f32.mrb[0].mxu0
        %v2905 = vadd.f32 %v2798, %v2904
        %v2906 = vpop.f32.mrb[0].mxu0
        %v2907 = vpop.f32.mrb[0].mxu0
        %v2908 = vadd.f32 %v2798, %v2907
        %v2909 = vpop.f32.mrb[0].mxu0
        %2910 = vmatprep.mubr.bf16.mxu0 0
        %2911 = vmatmul.mubr.bf16.gmra.mrb[0].mxu0 %v2816
        %v2912 = vpop.f32.mrb[0].mxu0
        %v2913 = vadd.f32 %v2798, %v2912
        %v2914 = vpop.f32.mrb[0].mxu0
        %v2915 = vpop.f32.mrb[0].mxu0
        %v2916 = vadd.f32 %v2798, %v2915
        %v2917 = vpop.f32.mrb[0].mxu0
        %2918 = vmatprep.mubr.bf16.mxu0 0
        %2919 = vmatmul.mubr.bf16.gmra.mrb[0].mxu0 %v2819
        %v2920 = vpop.f32.mrb[0].mxu0
        %v2921 = vadd.f32 %v2798, %v2920
        %v2922 = vpop.f32.mrb[0].mxu0
        %v2923 = vpop.f32.mrb[0].mxu0
        %v2924 = vadd.f32 %v2798, %v2923
        %v2925 = vpop.f32.mrb[0].mxu0
        %2926 = vmatprep.mubr.bf16.mxu0 0
        %2927 = vmatmul.mubr.bf16.gmra.mrb[0].mxu0 %v2822
        %v2928 = vpop.f32.mrb[0].mxu0
        %v2929 = vadd.f32 %v2798, %v2928
        %v2930 = vpop.f32.mrb[0].mxu0
        %v2931 = vpop.f32.mrb[0].mxu0
        %v2932 = vadd.f32 %v2798, %v2931
        %v2933 = vpop.f32.mrb[0].mxu0
        %2934 = vmatprep.mubr.bf16.mxu0 0
        %2935 = vmatmul.mubr.bf16.gmra.mrb[0].mxu0 %v2825
        %v2936 = vpop.f32.mrb[0].mxu0
        %v2937 = vadd.f32 %v2798, %v2936
        %v2938 = vpop.f32.mrb[0].mxu0
        %v2939 = vpop.f32.mrb[0].mxu0
        %v2940 = vadd.f32 %v2798, %v2939
        %v2941 = vpop.f32.mrb[0].mxu0
        %2942 = vmatprep.mubr.bf16.mxu0 0
        %2943 = vmatmul.mubr.bf16.gmra.mrb[0].mxu0 %v2828
        %v2944 = vpop.f32.mrb[0].mxu0
        %v2945 = vadd.f32 %v2798, %v2944
        %v2946 = vpop.f32.mrb[0].mxu0
        %v2947 = vpop.f32.mrb[0].mxu0
        %v2948 = vadd.f32 %v2798, %v2947
        %v2949 = vpop.f32.mrb[0].mxu0
        %2950 = vmatprep.mubr.bf16.mxu0 0
        %2951 = vmatmul.mubr.bf16.gmra.mrb[0].mxu0 %v2831
        %v2952 = vpop.f32.mrb[0].mxu0
        %v2953 = vadd.f32 %v2798, %v2952
        %v2954 = vpop.f32.mrb[0].mxu0
        %v2955 = vpop.f32.mrb[0].mxu0
        %v2956 = vadd.f32 %v2798, %v2955
        %v2957 = vpop.f32.mrb[0].mxu0
        %2958 = vmatprep.mubr.bf16.mxu0 0
        %2959 = vmatmul.mubr.bf16.gmra.mrb[0].mxu0 %v2834
        %v2960 = vpop.f32.mrb[0].mxu0
        %v2961 = vadd.f32 %v2798, %v2960
        %v2962 = vpop.f32.mrb[0].mxu0
        %v2963 = vpop.f32.mrb[0].mxu0
        %v2964 = vadd.f32 %v2798, %v2963
        %v2965 = vpop.f32.mrb[0].mxu0
        %2966 = vmatprep.mubr.bf16.mxu0 0
        %2967 = vmatmul.mubr.bf16.gmra.mrb[0].mxu0 %v2837
        %v2968 = vpop.f32.mrb[0].mxu0
        %v2969 = vadd.f32 %v2798, %v2968
        %v2970 = vpop.f32.mrb[0].mxu0
        %v2971 = vpop.f32.mrb[0].mxu0
        %v2972 = vadd.f32 %v2798, %v2971
        %v2973 = vpop.f32.mrb[0].mxu0
        %2974 = vmatprep.mubr.bf16.mxu0 0
        %2975 = vmatmul.mubr.bf16.gmra.mrb[0].mxu0 %v2840
        %v2976 = vpop.f32.mrb[0].mxu0
        %v2977 = vadd.f32 %v2798, %v2976
        %v2978 = vpop.f32.mrb[0].mxu0
        %v2979 = vpop.f32.mrb[0].mxu0
        %v2980 = vadd.f32 %v2798, %v2979
        %v2981 = vpop.f32.mrb[0].mxu0
        %2982 = vmatprep.mubr.bf16.mxu0 0
        %2983 = vmatmul.mubr.bf16.gmra.mrb[0].mxu0 %v2843
        %v2984 = vpop.f32.mrb[0].mxu0
        %v2985 = vadd.f32 %v2798, %v2984
        %v2986 = vpop.f32.mrb[0].mxu0
        %v2987 = vpop.f32.mrb[0].mxu0
        %v2988 = vadd.f32 %v2798, %v2987
        %v2989 = vpop.f32.mrb[0].mxu0
        %2990 = vmatprep.mubr.bf16.mxu0 0
        %2991 = vmatmul.mubr.bf16.gmra.mrb[0].mxu0 %v2846
        %v2992 = vpop.f32.mrb[0].mxu0
        %v2993 = vadd.f32 %v2798, %v2992
        %v2994 = vpop.f32.mrb[0].mxu0
        %v2995 = vpop.f32.mrb[0].mxu0
        %v2996 = vadd.f32 %v2798, %v2995
        %v2997 = vpop.f32.mrb[0].mxu0
        %2998 = vmatprep.mubr.bf16.mxu0 0
        %2999 = vmatmul.mubr.bf16.gmra.mrb[0].mxu0 %v2849
        %v3000 = vpop.f32.mrb[0].mxu0
        %v3001 = vadd.f32 %v2798, %v3000
        %v3002 = vpop.f32.mrb[0].mxu0
        %v3003 = vpop.f32.mrb[0].mxu0
        %v3004 = vadd.f32 %v2798, %v3003
        %v3005 = vpop.f32.mrb[0].mxu0
        %3006 = vmatprep.mubr.bf16.mxu0 0
        %3007 = vmatmul.mubr.bf16.gmra.mrb[0].mxu0 %v2852
        %v3008 = vpop.f32.mrb[0].mxu0
        %v3009 = vadd.f32 %v2798, %v3008
        %v3010 = vpop.f32.mrb[0].mxu0
        %v3011 = vpop.f32.mrb[0].mxu0
        %v3012 = vadd.f32 %v2798, %v3011
        %v3013 = vpop.f32.mrb[0].mxu0
        %3014 = vdwg.mxu0
        %3015 = vxpose.xlu0.b32.start [1/16] %v2889, 128
        %3016 = vxpose.xlu0.b32.cont [2/16] %v2892, 128
        %3017 = vxpose.xlu0.b32.cont [3/16] %v2897, 128
        %3018 = vxpose.xlu0.b32.cont [4/16] %v2900, 128
        %3019 = vxpose.xlu0.b32.cont [5/16] %v2905, 128
        %3020 = vxpose.xlu0.b32.cont [6/16] %v2908, 128
        %3021 = vxpose.xlu0.b32.cont [7/16] %v2913, 128
        %3022 = vxpose.xlu0.b32.cont [8/16] %v2916, 128
        %3023 = vxpose.xlu0.b32.cont [9/16] %v2921, 128
        %3024 = vxpose.xlu0.b32.cont [10/16] %v2924, 128
        %3025 = vxpose.xlu0.b32.cont [11/16] %v2929, 128
        %3026 = vxpose.xlu0.b32.cont [12/16] %v2932, 128
        %3027 = vxpose.xlu0.b32.cont [13/16] %v2937, 128
        %3028 = vxpose.xlu0.b32.cont [14/16] %v2940, 128
        %3029 = vxpose.xlu0.b32.cont [15/16] %v2945, 128
        %3030 = vxpose.xlu0.b32.end [16/16] %v2948, 128
        %v3031 = vpop.trf.xlu0
        %v3032 = vpop.trf.xlu0
        %v3033 = vpop.trf.xlu0
        %v3034 = vpop.trf.xlu0
        %v3035 = vpop.trf.xlu0
        %v3036 = vpop.trf.xlu0
        %v3037 = vpop.trf.xlu0
        %v3038 = vpop.trf.xlu0
        %v3039 = vpop.trf.xlu0
        %v3040 = vpop.trf.xlu0
        %v3041 = vpop.trf.xlu0
        %v3042 = vpop.trf.xlu0
        %v3043 = vpop.trf.xlu0
        %v3044 = vpop.trf.xlu0
        %v3045 = vpop.trf.xlu0
        %v3046 = vpop.trf.xlu0
        %3047 = vxpose.xlu0.b32.start [1/16] %v2953, 128
        %3048 = vxpose.xlu0.b32.cont [2/16] %v2956, 128
        %3049 = vxpose.xlu0.b32.cont [3/16] %v2961, 128
        %3050 = vxpose.xlu0.b32.cont [4/16] %v2964, 128
        %3051 = vxpose.xlu0.b32.cont [5/16] %v2969, 128
        %3052 = vxpose.xlu0.b32.cont [6/16] %v2972, 128
        %3053 = vxpose.xlu0.b32.cont [7/16] %v2977, 128
        %3054 = vxpose.xlu0.b32.cont [8/16] %v2980, 128
        %3055 = vxpose.xlu0.b32.cont [9/16] %v2985, 128
        %3056 = vxpose.xlu0.b32.cont [10/16] %v2988, 128
        %3057 = vxpose.xlu0.b32.cont [11/16] %v2993, 128
        %3058 = vxpose.xlu0.b32.cont [12/16] %v2996, 128
        %3059 = vxpose.xlu0.b32.cont [13/16] %v3001, 128
        %3060 = vxpose.xlu0.b32.cont [14/16] %v3004, 128
        %3061 = vxpose.xlu0.b32.cont [15/16] %v3009, 128
        %3062 = vxpose.xlu0.b32.end [16/16] %v3012, 128
        %v3063 = vpop.trf.xlu0
        %v3064 = vpop.trf.xlu0
        %v3065 = vpop.trf.xlu0
        %v3066 = vpop.trf.xlu0
        %v3067 = vpop.trf.xlu0
        %v3068 = vpop.trf.xlu0
        %v3069 = vpop.trf.xlu0
        %v3070 = vpop.trf.xlu0
        %v3071 = vpop.trf.xlu0
        %v3072 = vpop.trf.xlu0
        %v3073 = vpop.trf.xlu0
        %v3074 = vpop.trf.xlu0
        %v3075 = vpop.trf.xlu0
        %v3076 = vpop.trf.xlu0
        %v3077 = vpop.trf.xlu0
        %v3078 = vpop.trf.xlu0
        %v3079 = vld [vmem:[%s346] sm:$0xff]
        %v3080 = vld [vmem:[%s346 + $0x8] sm:$0xff]
        %v3081 = vadd.f32 %v3031, %v3079
        %v3082 = vadd.f32 %v3063, %v3080
        %v3083 = vpack.c.bf16 %v3081, %v3081
        %v3084 = vpack.c.bf16 %v3082, %v3082
        %v3087 = vunpack.c.l.b16 %v3083
        %v3088 = vunpack.c.l.b16 %v3084
        %v3089 = vpack.c.b16 %v3088, %v3087
        %3091 = vst [vmem:[%s379] sm:$0xff] %v3089
        %s3092 = sand.u32 %s188, 1
        %s3093 = scalar_lea.sflag [#allocation4], %s3092
        %s3094 = sand.u32 %s188, 1
        %s3095 = smul.addr %s3094, 8
        %s3096 = scalar_lea.vmem [#allocation13], %s3095
        // Predicated region
        $region69: #{tpu_custom_call.1} parent=43 // pred_check
          %p3097 = pneg %p198
        $region70: #{tpu_custom_call.1} parent=43 // pred_check_branch
          %3099 = sbr.rel (%p3097) target = $region72
        $region71: #{tpu_custom_call.1} parent=43 // pred_region
          %s3100 = smul.u32 2, %s33
          %s3102 = ssub.s32 128, 128
          %3103 = vsyncadd %s3093, %s3102
          %s3104 = smul.addr %s32, 2
          %s3105 = sadd.s32 %s3100, %s3104
          %s3106 = smul.addr %s3105, 64
          %s3107 = scalar_lea.hbm %s6, %s3106
          %s3109 = sshll.u32 %s3096, 4
          %s3110 = int_to_ptr.vmem [resolvable:$true] %s3109
          %3112 = dma.vmem_to_hbm [thread:$0]  %s3110, 128, %s3107, %s3093
        $region72: #{tpu_custom_call.1} parent=43 // pred_fallthru
          _
      $region44: #{tpu_custom_call.1} parent=5 // pred_fallthru
        _
      %p3113 = scmp.le.s32.totalorder 2, %s23
      // Predicated region
      $region73: #{tpu_custom_call.1} parent=5 // pred_check
        %p3114 = pneg %p3113
      $region74: #{tpu_custom_call.1} parent=5 // pred_check_branch
        %3116 = sbr.rel (%p3114) target = $region76
      $region75: #{tpu_custom_call.1} parent=5 // pred_region
        %s3117 = ssub.s32 %s23, 2
        // Predicated region
        $region77: #{tpu_custom_call.1} parent=75 // pred_check
          %p3118 = pneg %p204
        $region78: #{tpu_custom_call.1} parent=75 // pred_check_branch
          %3120 = sbr.rel (%p3118) target = $region80
        $region79: #{tpu_custom_call.1} parent=75 // pred_region
          %s3121 = sand.u32 %s189, 1
          %s3122 = scalar_lea.sflag [#allocation4], %s3121
          %s3123 = sand.u32 %s189, 1
          %s3124 = smul.addr %s3123, 8
          %s3125 = scalar_lea.vmem [#allocation13], %s3124
          %3126 = dma.done %s3122, 128
        $region80: #{tpu_custom_call.1} parent=75 // pred_fallthru
          _
      $region76: #{tpu_custom_call.1} parent=5 // pred_fallthru
        _
    $region6: #{tpu_custom_call.1} parent=1 // loop_footer
      %s27 = sadd.s32 1, %s23
    $region7: #{tpu_custom_call.1} parent=1 // loop_footer_branch
      %22 = sbr.rel target = $region3
    $region8: #{tpu_custom_call.1} parent=1 // loop_exit
      _
    %3127 = vsyncpa [#allocation3], 1
    %s3128 = scalar_lea.sflag [#allocation3], 1
    %3129 = vsyncpa %s3128, 1
    %3130 = vsyncpa [#allocation6], 1
    %3131 = vsyncpa [#allocation9], 1
    %3132 = vsyncpa [#allocation12], 1
    %s3133 = scalar_lea.sflag [#allocation12], 1
    %3134 = vsyncpa %s3133, 1
    %3135 = vsyncpa [#allocation4], 1
    %s3136 = scalar_lea.sflag [#allocation4], 1
    %3137 = vsyncpa %s3136, 1

</llo_original>
